<compile_context>
chip_gen: v5e
topology: v5e:2x2
jax: 0.10.0
libtpu: 0.0.40
codegen_flags: <defaults>
</compile_context>

<pallas_src>
import jax
import jax.numpy as jnp
from jax.experimental import pallas as pl
from jax.experimental.pallas import tpu as pltpu


def edge_network_kernel(node_ref, edge_feat_ref, edge_dom_ref, edge_rng_ref,
                        w1_ref, b1_ref, we_ref, tile_ref, sum_ref, out_ref):
    tE = edge_feat_ref.shape[0]
    N, H = node_ref.shape
    tN = out_ref.shape[0]

    # Zero the resident output accumulator at the start of the edge reduction.
    @pl.when(pl.program_id(1) == 0)
    def _init():
        out_ref[...] = jnp.zeros_like(out_ref)

    # --- Edge MLP: ReLU(edge_features @ W1^T + b1) (tiny K=F matmul, f32) ---
    mlp = jnp.dot(edge_feat_ref[...], w1_ref[...],
                  preferred_element_type=jnp.float32) + b1_ref[...]
    mlp = jnp.maximum(mlp, 0.0)                                         # (tE, H) f32

    # --- A_flat = mlp @ E_weight (original (H, H*H) layout), lane-dense N=H*H ---
    a_flat = jnp.dot(mlp.astype(jnp.bfloat16), we_ref[...],
                     preferred_element_type=jnp.float32)                # (tE, H*H) f32

    # --- Gather node_features[edge_range] via bf16 one-hot matmul (0/1 exact) ---
    lane_iota = jax.lax.broadcasted_iota(jnp.int32, (tE, N), 1)
    gather_oh = (lane_iota == edge_rng_ref[...]).astype(jnp.bfloat16)   # (tE, N)
    rn = jnp.dot(gather_oh, node_ref[...],
                 preferred_element_type=jnp.float32)                    # (tE, H) f32

    # --- rn_tile[e, i*H+k] = rn[e, k] via constant 0/1 tiling matmul (MXU) ---
    rn_tile = jnp.dot(rn.astype(jnp.bfloat16), tile_ref[...],
                      preferred_element_type=jnp.float32)               # (tE, H*H) f32

    # --- msg[e, i] = sum_k A_flat[e, i*H+k] * rn[e, k] ---
    # Full-lane-width VPU multiply, then segmented lane-sum via 0/1 matmul (MXU).
    prod = (a_flat * rn_tile).astype(jnp.bfloat16)                      # (tE, H*H)
    msg = jnp.dot(prod, sum_ref[...],
                  preferred_element_type=jnp.float32)                   # (tE, H) f32

    # --- Scatter-add into this node block via bf16 one-hot matmul ---
    # Padded edges have edge_domain == N (sentinel) -> all-zero one-hot column.
    n_start = pl.program_id(0) * tN
    sub_iota = jax.lax.broadcasted_iota(jnp.int32, (tN, tE), 0) + n_start
    scatter_oh = (sub_iota == edge_dom_ref[...]).astype(jnp.bfloat16)   # (tN, tE)
    out_ref[...] += jnp.dot(scatter_oh, msg.astype(jnp.bfloat16),
                            preferred_element_type=jnp.float32)


def edge_network_forward(node_features, edge_features, edge_domain, edge_range,
                         w1_t, b1, e_weight, *, edge_tile=128, node_tile=None):
    """node_features (N,H), edge_features (E,F), edge_domain/edge_range (E,) int,
    w1_t (F,H) = W1^T, b1 (H,), e_weight (H, H*H).  Returns (N,H) float32."""
    node_features = jnp.asarray(node_features, jnp.float32)
    edge_features = jnp.asarray(edge_features, jnp.float32)
    N, H = node_features.shape
    E, F = edge_features.shape

    tE = int(edge_tile)
    assert tE % 128 == 0, "edge_tile must be a multiple of 128"
    n_e_tiles = pl.cdiv(E, tE)
    E_pad = n_e_tiles * tE

    tN = N if node_tile is None else int(node_tile)
    assert N % tN == 0 and (tN == N or tN % 8 == 0), "bad node_tile"
    n_n_tiles = N // tN

    # Pad the edge stream; sentinel domain index == N masks padded edges.
    ef = jnp.zeros((E_pad, F), jnp.float32).at[:E, :].set(edge_features)
    dom = jnp.full((E_pad,), N, jnp.int32).at[:E].set(edge_domain.astype(jnp.int32))
    rng = jnp.zeros((E_pad,), jnp.int32).at[:E].set(edge_range.astype(jnp.int32))
    dom2d = dom.reshape(1, E_pad)
    rng2d = rng.reshape(E_pad, 1)

    # Constant 0/1 layout matrices (exact in bf16), built once host-side:
    #   T[k, i*H + k] = 1   (tiles rn H times along lanes)
    #   S[i*H + k, i] = 1   (segmented lane-sum back to H outputs)
    eye = jnp.eye(H, dtype=jnp.bfloat16)
    tile_mat = jnp.tile(eye, (1, H))                       # (H, H*H)
    sum_mat = jnp.repeat(eye, H, axis=0)                   # (H*H, H)

    node_bf = node_features.astype(jnp.bfloat16)           # hoisted cast (resident)
    we_bf = jnp.asarray(e_weight, jnp.float32).astype(jnp.bfloat16)   # (H, H*H)
    w1_f32 = jnp.asarray(w1_t, jnp.float32)
    b1_2d = jnp.asarray(b1, jnp.float32).reshape(1, H)

    grid_spec = pltpu.PrefetchScalarGridSpec(
        num_scalar_prefetch=0,
        grid=(n_n_tiles, n_e_tiles),
        in_specs=[
            pl.BlockSpec((N, H), lambda n, e: (0, 0)),        # node features (resident)
            pl.BlockSpec((tE, F), lambda n, e: (e, 0)),       # edge feature tile (streamed)
            pl.BlockSpec((1, tE), lambda n, e: (0, e)),       # edge domain tile
            pl.BlockSpec((tE, 1), lambda n, e: (e, 0)),       # edge range tile
            pl.BlockSpec((F, H), lambda n, e: (0, 0)),        # W1^T (resident)
            pl.BlockSpec((1, H), lambda n, e: (0, 0)),        # b1 (resident)
            pl.BlockSpec((H, H * H), lambda n, e: (0, 0)),    # E weight (resident)
            pl.BlockSpec((H, H * H), lambda n, e: (0, 0)),    # tile matrix (resident)
            pl.BlockSpec((H * H, H), lambda n, e: (0, 0)),    # sum matrix (resident)
        ],
        out_specs=pl.BlockSpec((tN, H), lambda n, e: (n, 0)), # accumulator over e
    )

    return pl.pallas_call(
        edge_network_kernel,
        out_shape=jax.ShapeDtypeStruct((N, H), jnp.float32),
        grid_spec=grid_spec,
        compiler_params=pltpu.CompilerParams(
            dimension_semantics=("parallel", "arbitrary"),
            vmem_limit_bytes=48 * 1024 * 1024,
        ),
    )(node_bf, ef, dom2d, rng2d, w1_f32, b1_2d, we_bf, tile_mat, sum_mat)


def edge_network_reference(node_features, edge_features, edge_domain, edge_range,
                           w1_t, b1, e_weight):
    H = node_features.shape[1]
    mlp = jax.nn.relu(edge_features @ w1_t + b1)
    A = (mlp @ e_weight).reshape(-1, H, H)
    rn = node_features[edge_range]
    msg = jnp.einsum("ehk,ek->eh", A, rn)
    out = jnp.zeros((node_features.shape[0], H), jnp.float32)
    return out.at[edge_domain].add(msg)


if __name__ == "__main__":
    # Small shapes consistent with the module; >1 edge tile to exercise the grid,
    # accumulator and padded-edge masking.
    n_nodes, n_edges = 64, 300
    n_hidden, n_features = 32, 16

    key = jax.random.PRNGKey(0)
    k_node, k_edge, k_dom, k_rng, k_w1, k_b1, k_we = jax.random.split(key, 7)

    node_features = jax.random.normal(k_node, (n_nodes, n_hidden), jnp.float32)
    edge_features = jax.random.normal(k_edge, (n_edges, n_features), jnp.float32)
    edge_domain = jax.random.randint(k_dom, (n_edges,), 0, n_nodes, jnp.int32)
    edge_range = jax.random.randint(k_rng, (n_edges,), 0, n_nodes, jnp.int32)

    # Parameters (shapes from __init__):
    #   E_mlp Linear(n_features, n_hidden): weight (H, F), bias (H,) -> pass W1^T (F, H)
    #   E Linear(H*H, H, bias=False): weight (H, H*H)
    w1_t = 0.1 * jax.random.normal(k_w1, (n_features, n_hidden), jnp.float32)
    b1 = 0.1 * jax.random.normal(k_b1, (n_hidden,), jnp.float32)
    e_weight = 0.05 * jax.random.normal(k_we, (n_hidden, n_hidden * n_hidden), jnp.float32)

    ref = edge_network_reference(node_features, edge_features, edge_domain,
                                 edge_range, w1_t, b1, e_weight)

    # Config 1: whole node dim as one output block (single-core friendly).
    out = edge_network_forward(node_features, edge_features, edge_domain,
                               edge_range, w1_t, b1, e_weight, edge_tile=128)
    out = jax.block_until_ready(out)
    assert out.shape == ref.shape
    assert jnp.allclose(out, ref, atol=2e-2, rtol=2e-2), (
        float(jnp.max(jnp.abs(out - ref))))

    # Config 2: node dim split into parallel tiles (megacore-shardable axis).
    out2 = edge_network_forward(node_features, edge_features, edge_domain,
                                edge_range, w1_t, b1, e_weight,
                                edge_tile=128, node_tile=32)
    out2 = jax.block_until_ready(out2)
    assert jnp.allclose(out2, ref, atol=2e-2, rtol=2e-2), (
        float(jnp.max(jnp.abs(out2 - ref))))

    print("KERNEL_OK")
</pallas_src>

<mosaic_0001>
module attributes {stable_mosaic.version = 11 : i64} {
  func.func @edge_network_kernel(%arg0: i32, %arg1: i32, %arg2: memref<64x32xbf16, #tpu.memory_space<vmem>>, %arg3: memref<128x16xf32, #tpu.memory_space<vmem>>, %arg4: memref<1x128xi32, #tpu.memory_space<vmem>>, %arg5: memref<128x1xi32, #tpu.memory_space<vmem>>, %arg6: memref<16x32xf32, #tpu.memory_space<vmem>>, %arg7: memref<1x32xf32, #tpu.memory_space<vmem>>, %arg8: memref<32x1024xbf16, #tpu.memory_space<vmem>>, %arg9: memref<32x1024xbf16, #tpu.memory_space<vmem>>, %arg10: memref<1024x32xbf16, #tpu.memory_space<vmem>>, %arg11: memref<64x32xf32, #tpu.memory_space<vmem>>) attributes {dimension_semantics = [#tpu.dimension_semantics<parallel>, #tpu.dimension_semantics<arbitrary>], iteration_bounds = array<i64: 1, 3>, scalar_prefetch = 0 : i64, scratch_operands = 0 : i64, tpu.core_type = #tpu.core_type<tc>, window_params = [{pipeline_mode = #tpu.pipeline_mode<synchronous>, transform_indices = @transform_0, window_bounds = array<i64: 64, 32>}, {transform_indices = @transform_1, window_bounds = array<i64: 128, 16>}, {transform_indices = @transform_2, window_bounds = array<i64: 1, 128>}, {transform_indices = @transform_3, window_bounds = array<i64: 128, 1>}, {pipeline_mode = #tpu.pipeline_mode<synchronous>, transform_indices = @transform_4, window_bounds = array<i64: 16, 32>}, {pipeline_mode = #tpu.pipeline_mode<synchronous>, transform_indices = @transform_5, window_bounds = array<i64: 1, 32>}, {pipeline_mode = #tpu.pipeline_mode<synchronous>, transform_indices = @transform_6, window_bounds = array<i64: 32, 1024>}, {pipeline_mode = #tpu.pipeline_mode<synchronous>, transform_indices = @transform_7, window_bounds = array<i64: 32, 1024>}, {pipeline_mode = #tpu.pipeline_mode<synchronous>, transform_indices = @transform_8, window_bounds = array<i64: 1024, 32>}, {transform_indices = @transform_9, window_bounds = array<i64: 64, 32>}]} {
    %c0_i32 = arith.constant 0 : i32
    %0 = arith.cmpi eq, %arg1, %c0_i32 : i32
    %1 = arith.extui %0 : i1 to i32
    %c0_i32_0 = arith.constant 0 : i32
    %2 = arith.cmpi ne, %1, %c0_i32_0 : i32
    scf.if %2 {
      %cst_28 = arith.constant 0.000000e+00 : f32
      %45 = vector.broadcast %cst_28 : f32 to vector<64x32xf32>
      %c0_29 = arith.constant 0 : index
      %c0_30 = arith.constant 0 : index
      %46 = vector.load %arg11[%c0_29, %c0_30] : memref<64x32xf32, #tpu.memory_space<vmem>>, vector<64x32xf32>
      tpu.vector_store %arg11[%c0_29, %c0_30], %45 {strides = array<i32>} : memref<64x32xf32, #tpu.memory_space<vmem>>, vector<64x32xf32>,
    } else {
    }
    %c0 = arith.constant 0 : index
    %c0_1 = arith.constant 0 : index
    %3 = vector.load %arg3[%c0, %c0_1] : memref<128x16xf32, #tpu.memory_space<vmem>>, vector<128x16xf32>
    %c0_2 = arith.constant 0 : index
    %c0_3 = arith.constant 0 : index
    %4 = vector.load %arg6[%c0_2, %c0_3] : memref<16x32xf32, #tpu.memory_space<vmem>>, vector<16x32xf32>
    %cst = arith.constant dense<0.000000e+00> : vector<128x32xf32>
    %5 = tpu.matmul %3, %4, %cst {dimension_numbers = #tpu.dot_dimension_numbers<[1], [0], [0], [1], [0, 0, 1, 1], [], []>} : vector<128x16xf32>, vector<16x32xf32>, vector<128x32xf32> -> vector<128x32xf32>
    %c0_4 = arith.constant 0 : index
    %c0_5 = arith.constant 0 : index
    %6 = vector.load %arg7[%c0_4, %c0_5] : memref<1x32xf32, #tpu.memory_space<vmem>>, vector<1x32xf32>
    %7 = vector.broadcast %6 : vector<1x32xf32> to vector<128x32xf32>
    %8 = arith.addf %5, %7 : vector<128x32xf32>
    %cst_6 = arith.constant 0.000000e+00 : f32
    %9 = vector.broadcast %cst_6 : f32 to vector<128x32xf32>
    %10 = arith.maximumf %8, %9 : vector<128x32xf32>
    %11 = arith.truncf %10 : vector<128x32xf32> to vector<128x32xbf16>
    %c0_7 = arith.constant 0 : index
    %c0_8 = arith.constant 0 : index
    %12 = vector.load %arg8[%c0_7, %c0_8] : memref<32x1024xbf16, #tpu.memory_space<vmem>>, vector<32x1024xbf16>
    %cst_9 = arith.constant dense<0.000000e+00> : vector<128x1024xf32>
    %13 = tpu.matmul %11, %12, %cst_9 {dimension_numbers = #tpu.dot_dimension_numbers<[1], [0], [0], [1], [0, 0, 1, 1], [], []>} : vector<128x32xbf16>, vector<32x1024xbf16>, vector<128x1024xf32> -> vector<128x1024xf32>
    %14 = tpu.iota {dimensions = array<i32: 1>} : vector<128x64xi32>
    %c0_10 = arith.constant 0 : index
    %c0_11 = arith.constant 0 : index
    %15 = vector.load %arg5[%c0_10, %c0_11] : memref<128x1xi32, #tpu.memory_space<vmem>>, vector<128x1xi32>
    %16 = vector.broadcast %15 : vector<128x1xi32> to vector<128x64xi32>
    %17 = arith.cmpi eq, %14, %16 : vector<128x64xi32>
    %18 = arith.extui %17 : vector<128x64xi1> to vector<128x64xi32>
    %19 = arith.sitofp %18 : vector<128x64xi32> to vector<128x64xf32>
    %20 = arith.truncf %19 : vector<128x64xf32> to vector<128x64xbf16>
    %c0_12 = arith.constant 0 : index
    %c0_13 = arith.constant 0 : index
    %21 = vector.load %arg2[%c0_12, %c0_13] : memref<64x32xbf16, #tpu.memory_space<vmem>>, vector<64x32xbf16>
    %cst_14 = arith.constant dense<0.000000e+00> : vector<128x32xf32>
    %22 = tpu.matmul %20, %21, %cst_14 {dimension_numbers = #tpu.dot_dimension_numbers<[1], [0], [0], [1], [0, 0, 1, 1], [], []>} : vector<128x64xbf16>, vector<64x32xbf16>, vector<128x32xf32> -> vector<128x32xf32>
    %23 = arith.truncf %22 : vector<128x32xf32> to vector<128x32xbf16>
    %c0_15 = arith.constant 0 : index
    %c0_16 = arith.constant 0 : index
    %24 = vector.load %arg9[%c0_15, %c0_16] : memref<32x1024xbf16, #tpu.memory_space<vmem>>, vector<32x1024xbf16>
    %cst_17 = arith.constant dense<0.000000e+00> : vector<128x1024xf32>
    %25 = tpu.matmul %23, %24, %cst_17 {dimension_numbers = #tpu.dot_dimension_numbers<[1], [0], [0], [1], [0, 0, 1, 1], [], []>} : vector<128x32xbf16>, vector<32x1024xbf16>, vector<128x1024xf32> -> vector<128x1024xf32>
    %26 = arith.mulf %13, %25 : vector<128x1024xf32>
    %27 = arith.truncf %26 : vector<128x1024xf32> to vector<128x1024xbf16>
    %c0_18 = arith.constant 0 : index
    %c0_19 = arith.constant 0 : index
    %28 = vector.load %arg10[%c0_18, %c0_19] : memref<1024x32xbf16, #tpu.memory_space<vmem>>, vector<1024x32xbf16>
    %cst_20 = arith.constant dense<0.000000e+00> : vector<128x32xf32>
    %29 = tpu.matmul %27, %28, %cst_20 {dimension_numbers = #tpu.dot_dimension_numbers<[1], [0], [0], [1], [0, 0, 1, 1], [], []>} : vector<128x1024xbf16>, vector<1024x32xbf16>, vector<128x32xf32> -> vector<128x32xf32>
    %c64_i32 = arith.constant 64 : i32
    %30 = arith.muli %arg0, %c64_i32 : i32
    %31 = tpu.iota {dimensions = array<i32: 0>} : vector<64x128xi32>
    %32 = vector.broadcast %30 : i32 to vector<64x128xi32>
    %33 = arith.addi %31, %32 : vector<64x128xi32>
    %c0_21 = arith.constant 0 : index
    %c0_22 = arith.constant 0 : index
    %34 = vector.load %arg4[%c0_21, %c0_22] : memref<1x128xi32, #tpu.memory_space<vmem>>, vector<1x128xi32>
    %35 = vector.broadcast %34 : vector<1x128xi32> to vector<64x128xi32>
    %36 = arith.cmpi eq, %33, %35 : vector<64x128xi32>
    %37 = arith.extui %36 : vector<64x128xi1> to vector<64x128xi32>
    %38 = arith.sitofp %37 : vector<64x128xi32> to vector<64x128xf32>
    %39 = arith.truncf %38 : vector<64x128xf32> to vector<64x128xbf16>
    %c0_23 = arith.constant 0 : index
    %c0_24 = arith.constant 0 : index
    %40 = vector.load %arg11[%c0_23, %c0_24] : memref<64x32xf32, #tpu.memory_space<vmem>>, vector<64x32xf32>
    %41 = arith.truncf %29 : vector<128x32xf32> to vector<128x32xbf16>
    %cst_25 = arith.constant dense<0.000000e+00> : vector<64x32xf32>
    %42 = tpu.matmul %39, %41, %cst_25 {dimension_numbers = #tpu.dot_dimension_numbers<[1], [0], [0], [1], [0, 0, 1, 1], [], []>} : vector<64x128xbf16>, vector<128x32xbf16>, vector<64x32xf32> -> vector<64x32xf32>
    %43 = arith.addf %40, %42 : vector<64x32xf32>
    %c0_26 = arith.constant 0 : index
    %c0_27 = arith.constant 0 : index
    %44 = vector.load %arg11[%c0_26, %c0_27] : memref<64x32xf32, #tpu.memory_space<vmem>>, vector<64x32xf32>
    tpu.vector_store %arg11[%c0_26, %c0_27], %43 {strides = array<i32>} : memref<64x32xf32, #tpu.memory_space<vmem>>, vector<64x32xf32>,
    return
  }
  func.func @transform_0(%arg0: i32, %arg1: i32) -> (i32, i32) {
    %c0_i32 = arith.constant 0 : i32
    %c0_i32_0 = arith.constant 0 : i32
    %c0_i32_1 = arith.constant 0 : i32
    return %c0_i32, %c0_i32_0 : i32, i32
  }
  func.func @transform_1(%arg0: i32, %arg1: i32) -> (i32, i32) {
    %c0_i32 = arith.constant 0 : i32
    %c0_i32_0 = arith.constant 0 : i32
    return %arg1, %c0_i32 : i32, i32
  }
  func.func @transform_2(%arg0: i32, %arg1: i32) -> (i32, i32) {
    %c0_i32 = arith.constant 0 : i32
    %c0_i32_0 = arith.constant 0 : i32
    return %c0_i32, %arg1 : i32, i32
  }
  func.func @transform_3(%arg0: i32, %arg1: i32) -> (i32, i32) {
    %c0_i32 = arith.constant 0 : i32
    %c0_i32_0 = arith.constant 0 : i32
    return %arg1, %c0_i32 : i32, i32
  }
  func.func @transform_4(%arg0: i32, %arg1: i32) -> (i32, i32) {
    %c0_i32 = arith.constant 0 : i32
    %c0_i32_0 = arith.constant 0 : i32
    %c0_i32_1 = arith.constant 0 : i32
    return %c0_i32, %c0_i32_0 : i32, i32
  }
  func.func @transform_5(%arg0: i32, %arg1: i32) -> (i32, i32) {
    %c0_i32 = arith.constant 0 : i32
    %c0_i32_0 = arith.constant 0 : i32
    %c0_i32_1 = arith.constant 0 : i32
    return %c0_i32, %c0_i32_0 : i32, i32
  }
  func.func @transform_6(%arg0: i32, %arg1: i32) -> (i32, i32) {
    %c0_i32 = arith.constant 0 : i32
    %c0_i32_0 = arith.constant 0 : i32
    %c0_i32_1 = arith.constant 0 : i32
    return %c0_i32, %c0_i32_0 : i32, i32
  }
  func.func @transform_7(%arg0: i32, %arg1: i32) -> (i32, i32) {
    %c0_i32 = arith.constant 0 : i32
    %c0_i32_0 = arith.constant 0 : i32
    %c0_i32_1 = arith.constant 0 : i32
    return %c0_i32, %c0_i32_0 : i32, i32
  }
  func.func @transform_8(%arg0: i32, %arg1: i32) -> (i32, i32) {
    %c0_i32 = arith.constant 0 : i32
    %c0_i32_0 = arith.constant 0 : i32
    %c0_i32_1 = arith.constant 0 : i32
    return %c0_i32, %c0_i32_0 : i32, i32
  }
  func.func @transform_9(%arg0: i32, %arg1: i32) -> (i32, i32) {
    %c0_i32 = arith.constant 0 : i32
    %c0_i32_0 = arith.constant 0 : i32
    return %arg0, %c0_i32 : i32, i32
  }
}

</mosaic_0001>

<llo_original>
// kernel: tpu_custom_call.1
$region0: #{tpu_custom_call.1}
  #allocation0 [shape = 'u32[]', space=smem, size = 0x4, offset = 0x4, fixed_abs, tag = 'smem constant byte address 0x4 - core index']
  #allocation1 [shape = 'u32[72,128]{1,0:T(1,128)}', space=vmem, size = 0x9000, scoped, tag = 'internal scratch']
  %s0 = inlined_call_operand.vmem [shape: bf16[64,32], index: 0, kind: input, shape index: {}]
  %s1 = inlined_call_operand.vmem [shape: f32[384,16], index: 1, kind: input, shape index: {}]
  %s2 = inlined_call_operand.vmem [shape: s32[1,384], index: 2, kind: input, shape index: {}]
  %s3 = inlined_call_operand.vmem [shape: s32[384,1], index: 3, kind: input, shape index: {}]
  %s4 = inlined_call_operand.vmem [shape: f32[16,32], index: 4, kind: input, shape index: {}]
  %s5 = inlined_call_operand.vmem [shape: f32[1,32], index: 5, kind: input, shape index: {}]
  %s6 = inlined_call_operand.vmem [shape: bf16[32,1024], index: 6, kind: input, shape index: {}]
  %s7 = inlined_call_operand.vmem [shape: bf16[32,1024], index: 7, kind: input, shape index: {}]
  %s8 = inlined_call_operand.vmem [shape: bf16[1024,32], index: 8, kind: input, shape index: {}]
  %s9 = inlined_call_operand.vmem [shape: f32[64,32], index: 9, kind: output, shape index: {}]
  %s10 = sld [smem:[#allocation0]]
  $region73: #{tpu_custom_call.1} parent=0
    _
  %s12 = ssub.s32 1, %s10
  %s13 = scalar_select 0, %s12, %s10
  loop: start=0, step=1, limit=5
  $region2: #{tpu_custom_call.1} parent=0 // loop_pre_header
    _
  $region3: #{tpu_custom_call.1} parent=0 // loop_header
    %s15 = sphi 0, %s19
    %p16 = scmp.ge.s32.totalorder %s15, 5
    %s22 = sphi 0, %s34
    %s23 = sphi 0, %s30
    %s24 = sphi 0, %s22
    %s25 = sphi 0, %s23
    %s26 = sphi 0, %s24
    %s27 = sphi 0, %s25
    %s35 = sphi 0, %s35
    %s37 = sphi 0, %s35
    %s38 = sphi 0, %s37
    %s52 = sphi 0, %s38
    %s58 = sphi 0, %s60
    %s61 = sphi 0, %s58
    %s62 = sphi 0, %s61
    %s78 = sphi 0, %s62
    %s84 = sphi 0, %s86
    %s87 = sphi 0, %s84
    %s88 = sphi 0, %s87
    %s104 = sphi 0, %s88
    %s110 = sphi 0, %s112
    %s113 = sphi 0, %s110
    %s114 = sphi 0, %s113
    %s130 = sphi 0, %s114
    %s134 = sphi 0, %s134
    %s136 = sphi 0, %s134
    %s137 = sphi 0, %s136
    %s151 = sphi 0, %s137
    %s155 = sphi 0, %s155
    %s157 = sphi 0, %s155
    %s158 = sphi 0, %s157
    %s172 = sphi 0, %s158
    %s176 = sphi 0, %s176
    %s178 = sphi 0, %s176
    %s179 = sphi 0, %s178
    %s193 = sphi 0, %s179
    %s197 = sphi 0, %s197
    %s199 = sphi 0, %s197
    %s200 = sphi 0, %s199
    %s214 = sphi 0, %s200
    %s218 = sphi 0, %s218
    %s220 = sphi 0, %s218
    %s221 = sphi 0, %s220
    %s235 = sphi 0, %s221
    %s241 = sphi 0, %s243
    %s244 = sphi 0, %s241
    %s245 = sphi 0, %s244
    %s261 = sphi 0, %s245
  $region4: #{tpu_custom_call.1} parent=0 // loop_header_branch
    %18 = sbr.rel (%p16) target = $region8
  $region5: #{tpu_custom_call.1} parent=0 // loop_body
    %s20 = ssub.s32 %s15, 1
    %s21 = ssub.s32 %s15, 2
    %s28 = sadd.s32 1, %s23
    %p29 = scmp.ge.s32.totalorder %s28, 3
    %s30 = scalar_select %p29, 0, %s28
    %s31 = sadd.s32 1, %s22
    %s32 = scalar_select %p29, %s31, %s22
    %p33 = scmp.ge.s32.totalorder %s32, 1
    %s34 = scalar_select %p33, 0, %s32
    %s36 = sadd.s32 %s35, 1
    %p39 = scmp.eq.s32.totalorder %s15, 2
    %p40 = scmp.ne.s32.totalorder %s35, %s37
    %p41 = scmp.eq.s32.totalorder %s15, 0
    %p42 = por %p40, %p41
    %p43 = scmp.ne.s32.totalorder %s35, %s37
    %p44 = scmp.eq.s32.totalorder %s20, 2
    %p45 = por %p43, %p44
    %p46 = scmp.ne.s32.totalorder %s37, %s38
    %p47 = scmp.eq.s32.totalorder %s20, 0
    %p48 = por %p46, %p47
    %p49 = scmp.ne.s32.totalorder %s37, %s38
    %p50 = scmp.eq.s32.totalorder %s21, 2
    %p51 = por %p49, %p50
    %p53 = scmp.ne.s32.totalorder %s38, %s52
    %p54 = scmp.eq.s32.totalorder %s21, 0
    %p55 = por %p53, %p54
    %s56 = ssub.s32 %s23, %s30
    %p57 = scmp.eq.s32.totalorder %s56, 0
    %s59 = sadd.s32 %s58, 1
    %s60 = scalar_select %p57, %s58, %s59
    %p63 = pneg %p57
    %p64 = scmp.eq.s32.totalorder %s15, 2
    %p65 = por %p63, %p64
    %p66 = scmp.ne.s32.totalorder %s58, %s61
    %p67 = scmp.eq.s32.totalorder %s15, 0
    %p68 = por %p66, %p67
    %p69 = scmp.ne.s32.totalorder %s58, %s61
    %p70 = scmp.eq.s32.totalorder %s20, 2
    %p71 = por %p69, %p70
    %p72 = scmp.ne.s32.totalorder %s61, %s62
    %p73 = scmp.eq.s32.totalorder %s20, 0
    %p74 = por %p72, %p73
    %p75 = scmp.ne.s32.totalorder %s61, %s62
    %p76 = scmp.eq.s32.totalorder %s21, 2
    %p77 = por %p75, %p76
    %p79 = scmp.ne.s32.totalorder %s62, %s78
    %p80 = scmp.eq.s32.totalorder %s21, 0
    %p81 = por %p79, %p80
    %s82 = ssub.s32 %s23, %s30
    %p83 = scmp.eq.s32.totalorder %s82, 0
    %s85 = sadd.s32 %s84, 1
    %s86 = scalar_select %p83, %s84, %s85
    %p89 = pneg %p83
    %p90 = scmp.eq.s32.totalorder %s15, 2
    %p91 = por %p89, %p90
    %p92 = scmp.ne.s32.totalorder %s84, %s87
    %p93 = scmp.eq.s32.totalorder %s15, 0
    %p94 = por %p92, %p93
    %p95 = scmp.ne.s32.totalorder %s84, %s87
    %p96 = scmp.eq.s32.totalorder %s20, 2
    %p97 = por %p95, %p96
    %p98 = scmp.ne.s32.totalorder %s87, %s88
    %p99 = scmp.eq.s32.totalorder %s20, 0
    %p100 = por %p98, %p99
    %p101 = scmp.ne.s32.totalorder %s87, %s88
    %p102 = scmp.eq.s32.totalorder %s21, 2
    %p103 = por %p101, %p102
    %p105 = scmp.ne.s32.totalorder %s88, %s104
    %p106 = scmp.eq.s32.totalorder %s21, 0
    %p107 = por %p105, %p106
    %s108 = ssub.s32 %s23, %s30
    %p109 = scmp.eq.s32.totalorder %s108, 0
    %s111 = sadd.s32 %s110, 1
    %s112 = scalar_select %p109, %s110, %s111
    %p115 = pneg %p109
    %p116 = scmp.eq.s32.totalorder %s15, 2
    %p117 = por %p115, %p116
    %p118 = scmp.ne.s32.totalorder %s110, %s113
    %p119 = scmp.eq.s32.totalorder %s15, 0
    %p120 = por %p118, %p119
    %p121 = scmp.ne.s32.totalorder %s110, %s113
    %p122 = scmp.eq.s32.totalorder %s20, 2
    %p123 = por %p121, %p122
    %p124 = scmp.ne.s32.totalorder %s113, %s114
    %p125 = scmp.eq.s32.totalorder %s20, 0
    %p126 = por %p124, %p125
    %p127 = scmp.ne.s32.totalorder %s113, %s114
    %p128 = scmp.eq.s32.totalorder %s21, 2
    %p129 = por %p127, %p128
    %p131 = scmp.ne.s32.totalorder %s114, %s130
    %p132 = scmp.eq.s32.totalorder %s21, 0
    %p133 = por %p131, %p132
    %s135 = sadd.s32 %s134, 1
    %p138 = scmp.eq.s32.totalorder %s15, 2
    %p139 = scmp.ne.s32.totalorder %s134, %s136
    %p140 = scmp.eq.s32.totalorder %s15, 0
    %p141 = por %p139, %p140
    %p142 = scmp.ne.s32.totalorder %s134, %s136
    %p143 = scmp.eq.s32.totalorder %s20, 2
    %p144 = por %p142, %p143
    %p145 = scmp.ne.s32.totalorder %s136, %s137
    %p146 = scmp.eq.s32.totalorder %s20, 0
    %p147 = por %p145, %p146
    %p148 = scmp.ne.s32.totalorder %s136, %s137
    %p149 = scmp.eq.s32.totalorder %s21, 2
    %p150 = por %p148, %p149
    %p152 = scmp.ne.s32.totalorder %s137, %s151
    %p153 = scmp.eq.s32.totalorder %s21, 0
    %p154 = por %p152, %p153
    %s156 = sadd.s32 %s155, 1
    %p159 = scmp.eq.s32.totalorder %s15, 2
    %p160 = scmp.ne.s32.totalorder %s155, %s157
    %p161 = scmp.eq.s32.totalorder %s15, 0
    %p162 = por %p160, %p161
    %p163 = scmp.ne.s32.totalorder %s155, %s157
    %p164 = scmp.eq.s32.totalorder %s20, 2
    %p165 = por %p163, %p164
    %p166 = scmp.ne.s32.totalorder %s157, %s158
    %p167 = scmp.eq.s32.totalorder %s20, 0
    %p168 = por %p166, %p167
    %p169 = scmp.ne.s32.totalorder %s157, %s158
    %p170 = scmp.eq.s32.totalorder %s21, 2
    %p171 = por %p169, %p170
    %p173 = scmp.ne.s32.totalorder %s158, %s172
    %p174 = scmp.eq.s32.totalorder %s21, 0
    %p175 = por %p173, %p174
    %s177 = sadd.s32 %s176, 1
    %p180 = scmp.eq.s32.totalorder %s15, 2
    %p181 = scmp.ne.s32.totalorder %s176, %s178
    %p182 = scmp.eq.s32.totalorder %s15, 0
    %p183 = por %p181, %p182
    %p184 = scmp.ne.s32.totalorder %s176, %s178
    %p185 = scmp.eq.s32.totalorder %s20, 2
    %p186 = por %p184, %p185
    %p187 = scmp.ne.s32.totalorder %s178, %s179
    %p188 = scmp.eq.s32.totalorder %s20, 0
    %p189 = por %p187, %p188
    %p190 = scmp.ne.s32.totalorder %s178, %s179
    %p191 = scmp.eq.s32.totalorder %s21, 2
    %p192 = por %p190, %p191
    %p194 = scmp.ne.s32.totalorder %s179, %s193
    %p195 = scmp.eq.s32.totalorder %s21, 0
    %p196 = por %p194, %p195
    %s198 = sadd.s32 %s197, 1
    %p201 = scmp.eq.s32.totalorder %s15, 2
    %p202 = scmp.ne.s32.totalorder %s197, %s199
    %p203 = scmp.eq.s32.totalorder %s15, 0
    %p204 = por %p202, %p203
    %p205 = scmp.ne.s32.totalorder %s197, %s199
    %p206 = scmp.eq.s32.totalorder %s20, 2
    %p207 = por %p205, %p206
    %p208 = scmp.ne.s32.totalorder %s199, %s200
    %p209 = scmp.eq.s32.totalorder %s20, 0
    %p210 = por %p208, %p209
    %p211 = scmp.ne.s32.totalorder %s199, %s200
    %p212 = scmp.eq.s32.totalorder %s21, 2
    %p213 = por %p211, %p212
    %p215 = scmp.ne.s32.totalorder %s200, %s214
    %p216 = scmp.eq.s32.totalorder %s21, 0
    %p217 = por %p215, %p216
    %s219 = sadd.s32 %s218, 1
    %p222 = scmp.eq.s32.totalorder %s15, 2
    %p223 = scmp.ne.s32.totalorder %s218, %s220
    %p224 = scmp.eq.s32.totalorder %s15, 0
    %p225 = por %p223, %p224
    %p226 = scmp.ne.s32.totalorder %s218, %s220
    %p227 = scmp.eq.s32.totalorder %s20, 2
    %p228 = por %p226, %p227
    %p229 = scmp.ne.s32.totalorder %s220, %s221
    %p230 = scmp.eq.s32.totalorder %s20, 0
    %p231 = por %p229, %p230
    %p232 = scmp.ne.s32.totalorder %s220, %s221
    %p233 = scmp.eq.s32.totalorder %s21, 2
    %p234 = por %p232, %p233
    %p236 = scmp.ne.s32.totalorder %s221, %s235
    %p237 = scmp.eq.s32.totalorder %s21, 0
    %p238 = por %p236, %p237
    %s239 = ssub.s32 %s22, %s34
    %p240 = scmp.eq.s32.totalorder %s239, 0
    %s242 = sadd.s32 %s241, 1
    %s243 = scalar_select %p240, %s241, %s242
    %p246 = pneg %p240
    %p247 = scmp.eq.s32.totalorder %s15, 2
    %p248 = por %p246, %p247
    %p249 = scmp.ne.s32.totalorder %s241, %s244
    %p250 = scmp.eq.s32.totalorder %s15, 0
    %p251 = por %p249, %p250
    %p252 = scmp.ne.s32.totalorder %s241, %s244
    %p253 = scmp.eq.s32.totalorder %s20, 2
    %p254 = por %p252, %p253
    %p255 = scmp.ne.s32.totalorder %s244, %s245
    %p256 = scmp.eq.s32.totalorder %s20, 0
    %p257 = por %p255, %p256
    %p258 = scmp.ne.s32.totalorder %s244, %s245
    %p259 = scmp.eq.s32.totalorder %s21, 2
    %p260 = por %p258, %p259
    %p262 = scmp.ne.s32.totalorder %s245, %s261
    %p263 = scmp.eq.s32.totalorder %s21, 0
    %p264 = por %p262, %p263
    %p265 = scmp.le.s32.totalorder 1, %s15
    %p266 = scmp.lt.s32.totalorder %s15, 4
    %p267 = pnand %p265, %p266
    %p268 = pneg %p267
    // Predicated region
    $region9: #{tpu_custom_call.1} parent=5 // pred_check
      _
    $region10: #{tpu_custom_call.1} parent=5 // pred_check_branch
      %270 = sbr.rel (%p267) target = $region12
    $region11: #{tpu_custom_call.1} parent=5 // pred_region
      %s271 = ssub.s32 %s15, 1
      // Predicated region
      $region13: #{tpu_custom_call.1} parent=11 // pred_check
        %p272 = pneg %p48
      $region14: #{tpu_custom_call.1} parent=11 // pred_check_branch
        %274 = sbr.rel (%p272) target = $region16
      $region15: #{tpu_custom_call.1} parent=11 // pred_region
        _
      $region16: #{tpu_custom_call.1} parent=11 // pred_fallthru
        _
      // Predicated region
      $region17: #{tpu_custom_call.1} parent=11 // pred_check
        %p275 = pneg %p147
      $region18: #{tpu_custom_call.1} parent=11 // pred_check_branch
        %277 = sbr.rel (%p275) target = $region20
      $region19: #{tpu_custom_call.1} parent=11 // pred_region
        _
      $region20: #{tpu_custom_call.1} parent=11 // pred_fallthru
        _
      // Predicated region
      $region21: #{tpu_custom_call.1} parent=11 // pred_check
        %p278 = pneg %p168
      $region22: #{tpu_custom_call.1} parent=11 // pred_check_branch
        %280 = sbr.rel (%p278) target = $region24
      $region23: #{tpu_custom_call.1} parent=11 // pred_region
        _
      $region24: #{tpu_custom_call.1} parent=11 // pred_fallthru
        _
      // Predicated region
      $region25: #{tpu_custom_call.1} parent=11 // pred_check
        %p281 = pneg %p189
      $region26: #{tpu_custom_call.1} parent=11 // pred_check_branch
        %283 = sbr.rel (%p281) target = $region28
      $region27: #{tpu_custom_call.1} parent=11 // pred_region
        _
      $region28: #{tpu_custom_call.1} parent=11 // pred_fallthru
        _
      // Predicated region
      $region29: #{tpu_custom_call.1} parent=11 // pred_check
        %p284 = pneg %p210
      $region30: #{tpu_custom_call.1} parent=11 // pred_check_branch
        %286 = sbr.rel (%p284) target = $region32
      $region31: #{tpu_custom_call.1} parent=11 // pred_region
        _
      $region32: #{tpu_custom_call.1} parent=11 // pred_fallthru
        _
      // Predicated region
      $region33: #{tpu_custom_call.1} parent=11 // pred_check
        %p287 = pneg %p231
      $region34: #{tpu_custom_call.1} parent=11 // pred_check_branch
        %289 = sbr.rel (%p287) target = $region36
      $region35: #{tpu_custom_call.1} parent=11 // pred_region
        _
      $region36: #{tpu_custom_call.1} parent=11 // pred_fallthru
        _
    $region12: #{tpu_custom_call.1} parent=5 // pred_fallthru
      _
    %p290 = scmp.lt.s32.totalorder %s15, 3
    // Predicated region
    $region37: #{tpu_custom_call.1} parent=5 // pred_check
      %p291 = pneg %p290
    $region38: #{tpu_custom_call.1} parent=5 // pred_check_branch
      %293 = sbr.rel (%p291) target = $region40
    $region39: #{tpu_custom_call.1} parent=5 // pred_region
      // Predicated region
      $region41: #{tpu_custom_call.1} parent=39 // pred_check
        %p294 = pneg %p68
      $region42: #{tpu_custom_call.1} parent=39 // pred_check_branch
        %296 = sbr.rel (%p294) target = $region44
      $region43: #{tpu_custom_call.1} parent=39 // pred_region
        %s297 = smul.u32 16, %s23
        %p298 = scmp.lt.s32.totalorder %s297, 47
        %s299 = scalar_select %p298, %s297, 47
        %s300 = smul.addr %s299, 8
        %s301 = scalar_lea.vmem %s1, %s300
        %s302 = smul.u32 16, %s23
      $region44: #{tpu_custom_call.1} parent=39 // pred_fallthru
        _
      // Predicated region
      $region45: #{tpu_custom_call.1} parent=39 // pred_check
        %p303 = pneg %p94
      $region46: #{tpu_custom_call.1} parent=39 // pred_check_branch
        %305 = sbr.rel (%p303) target = $region48
      $region47: #{tpu_custom_call.1} parent=39 // pred_region
        %p306 = scmp.lt.s32.totalorder %s23, 2
        %s307 = scalar_select %p306, %s23, 2
        %s308 = scalar_lea.vmem %s2, %s307
      $region48: #{tpu_custom_call.1} parent=39 // pred_fallthru
        _
      // Predicated region
      $region49: #{tpu_custom_call.1} parent=39 // pred_check
        %p309 = pneg %p120
      $region50: #{tpu_custom_call.1} parent=39 // pred_check_branch
        %311 = sbr.rel (%p309) target = $region52
      $region51: #{tpu_custom_call.1} parent=39 // pred_region
        %s312 = smul.u32 16, %s23
        %p313 = scmp.lt.s32.totalorder %s312, 47
        %s314 = scalar_select %p313, %s312, 47
        %s315 = smul.addr %s314, 8
        %s316 = scalar_lea.vmem %s3, %s315
        %s317 = smul.u32 16, %s23
      $region52: #{tpu_custom_call.1} parent=39 // pred_fallthru
        _
    $region40: #{tpu_custom_call.1} parent=5 // pred_fallthru
      _
    %p318 = scmp.le.s32.totalorder 1, %s15
    %p319 = scmp.lt.s32.totalorder %s15, 4
    %p320 = pnand %p318, %p319
    %p321 = pneg %p320
    // Predicated region
    $region53: #{tpu_custom_call.1} parent=5 // pred_check
      _
    $region54: #{tpu_custom_call.1} parent=5 // pred_check_branch
      %323 = sbr.rel (%p320) target = $region56
    $region55: #{tpu_custom_call.1} parent=5 // pred_region
      %s324 = ssub.s32 %s15, 1
      %p325 = pneg %p48
      %p326 = pneg %p45
      %s327 = smul.u32 16, %s25
      %p328 = scmp.lt.s32.totalorder %s327, 47
      %s329 = scalar_select %p328, %s327, 47
      %s330 = smul.addr %s329, 8
      %s331 = scalar_lea.vmem %s1, %s330
      %p332 = pneg %p74
      %p333 = pneg %p71
      %p334 = scmp.lt.s32.totalorder %s25, 2
      %s335 = scalar_select %p334, %s25, 2
      %s336 = scalar_lea.vmem %s2, %s335
      %p337 = pneg %p100
      %p338 = pneg %p97
      %s339 = smul.u32 16, %s25
      %p340 = scmp.lt.s32.totalorder %s339, 47
      %s341 = scalar_select %p340, %s339, 47
      %s342 = smul.addr %s341, 8
      %s343 = scalar_lea.vmem %s3, %s342
      %p344 = pneg %p126
      %p345 = pneg %p123
      %p346 = pneg %p147
      %p347 = pneg %p144
      %p348 = pneg %p168
      %p349 = pneg %p165
      %p350 = pneg %p189
      %p351 = pneg %p186
      %p352 = pneg %p210
      %p353 = pneg %p207
      %p354 = pneg %p231
      %p355 = pneg %p228
      %p356 = pneg %p257
      %p357 = pneg %p254
      %s358 = smul.u32 8, %s24
      %p359 = scmp.lt.s32.totalorder %s358, 7
      %s360 = scalar_select %p359, %s358, 7
      %s361 = smul.addr %s360, 8
      %s362 = scalar_lea.vmem %s9, %s361
      %s363 = smul.u32 16, %s25
      %p364 = scmp.lt.s32.totalorder %s363, 47
      %s365 = scalar_select %p364, %s363, 47
      %s366 = smul.addr %s365, 8
      %s367 = scalar_lea.vmem %s1, %s366
      %s368 = smul.u32 16, %s25
      %p369 = scmp.lt.s32.totalorder %s25, 2
      %s370 = scalar_select %p369, %s25, 2
      %s371 = scalar_lea.vmem %s2, %s370
      %s372 = smul.u32 16, %s25
      %p373 = scmp.lt.s32.totalorder %s372, 47
      %s374 = scalar_select %p373, %s372, 47
      %s375 = smul.addr %s374, 8
      %s376 = scalar_lea.vmem %s3, %s375
      %s377 = smul.u32 16, %s25
      %s378 = smul.u32 8, %s24
      %p379 = scmp.lt.s32.totalorder %s378, 7
      %s380 = scalar_select %p379, %s378, 7
      %s381 = smul.addr %s380, 8
      %s382 = scalar_lea.vmem %s9, %s381
      %s383 = smul.u32 8, %s24
      %p385 = scmp.eq.s32.totalorder %s25, 0
      // Predicated region
      $region57: #{tpu_custom_call.1} parent=55 // pred_check
        %p386 = pneg %p385
      $region58: #{tpu_custom_call.1} parent=55 // pred_check_branch
        %388 = sbr.rel (%p386) target = $region60
      $region59: #{tpu_custom_call.1} parent=55 // pred_region
        %vm389 = vcmask 261120
        %390 = vst.msk [vmem:[%s382] sm:$0xff] %vm389, 0.0
        %391 = vst.msk [vmem:[%s382 + $0x8] sm:$0xff] %vm389, 0.0
        %392 = vst.msk [vmem:[%s382 + $0x10] sm:$0xff] %vm389, 0.0
        %393 = vst.msk [vmem:[%s382 + $0x18] sm:$0xff] %vm389, 0.0
        %394 = vst.msk [vmem:[%s382 + $0x20] sm:$0xff] %vm389, 0.0
        %395 = vst.msk [vmem:[%s382 + $0x28] sm:$0xff] %vm389, 0.0
        %396 = vst.msk [vmem:[%s382 + $0x30] sm:$0xff] %vm389, 0.0
        %397 = vst.msk [vmem:[%s382 + $0x38] sm:$0xff] %vm389, 0.0
      $region60: #{tpu_custom_call.1} parent=55 // pred_fallthru
        _
      %v398 = vld [vmem:[%s367] sm:$0xff]
      %v399 = vld [vmem:[%s367 + $0x8] sm:$0xff]
      %v400 = vld [vmem:[%s367 + $0x10] sm:$0xff]
      %v401 = vld [vmem:[%s367 + $0x18] sm:$0xff]
      %v402 = vld [vmem:[%s367 + $0x20] sm:$0xff]
      %v403 = vld [vmem:[%s367 + $0x28] sm:$0xff]
      %v404 = vld [vmem:[%s367 + $0x30] sm:$0xff]
      %v405 = vld [vmem:[%s367 + $0x38] sm:$0xff]
      %v406 = vld [vmem:[%s367 + $0x40] sm:$0xff]
      %v407 = vld [vmem:[%s367 + $0x48] sm:$0xff]
      %v408 = vld [vmem:[%s367 + $0x50] sm:$0xff]
      %v409 = vld [vmem:[%s367 + $0x58] sm:$0xff]
      %v410 = vld [vmem:[%s367 + $0x60] sm:$0xff]
      %v411 = vld [vmem:[%s367 + $0x68] sm:$0xff]
      %v412 = vld [vmem:[%s367 + $0x70] sm:$0xff]
      %v413 = vld [vmem:[%s367 + $0x78] sm:$0xff]
      %v414 = vld [vmem:[%s4] sm:$0xff]
      %v415 = vld [vmem:[%s4 + $0x8] sm:$0xff]
      %v416 = vld [vmem:[%s5] sm:$0x1]
      %v418 = vperm.slane %v416, 0
      %vm420 = vcmask 130048
      %v422 = vsel %vm420, %v398, 0
      %v425 = vsel %vm420, %v399, 0
      %v428 = vsel %vm420, %v400, 0
      %v431 = vsel %vm420, %v401, 0
      %v434 = vsel %vm420, %v402, 0
      %v437 = vsel %vm420, %v403, 0
      %v440 = vsel %vm420, %v404, 0
      %v443 = vsel %vm420, %v405, 0
      %v446 = vsel %vm420, %v406, 0
      %v449 = vsel %vm420, %v407, 0
      %v452 = vsel %vm420, %v408, 0
      %v455 = vsel %vm420, %v409, 0
      %v458 = vsel %vm420, %v410, 0
      %v461 = vsel %vm420, %v411, 0
      %v464 = vsel %vm420, %v412, 0
      %v467 = vsel %vm420, %v413, 0
      %469 = vmatpush.msra.mxu0 0.0
      %470 = vmatpush.msra.mxu0 0.0
      %471 = vmatpush.msra.mxu0 0.0
      %472 = vmatpush.msra.mxu0 0.0
      %473 = vmatpush.msra.mxu0 0.0
      %474 = vmatpush.msra.mxu0 0.0
      %475 = vmatpush.msra.mxu0 0.0
      %476 = vmatpush.msra.mxu0 0.0
      %477 = vmatpush.msra.mxu0 0.0
      %478 = vmatpush.msra.mxu0 0.0
      %479 = vmatpush.msra.mxu0 0.0
      %480 = vmatpush.msra.mxu0 0.0
      %481 = vmatpush.msra.mxu0 0.0
      %482 = vmatpush.msra.mxu0 0.0
      %483 = vmatpush.msra.mxu0 %v415
      %484 = vmatpush.msra.mxu0 %v414
      %485 = vmatmul.f32.gmra.mxu0 %v422
      %v486 = vpop.f32.mrf.mxu0
      %v487 = vadd.f32 %v418, %v486
      %488 = vmatmul.f32.gmra.mxu0 %v425
      %v489 = vpop.f32.mrf.mxu0
      %v490 = vadd.f32 %v418, %v489
      %491 = vmatmul.f32.gmra.mxu0 %v428
      %v492 = vpop.f32.mrf.mxu0
      %v493 = vadd.f32 %v418, %v492
      %494 = vmatmul.f32.gmra.mxu0 %v431
      %v495 = vpop.f32.mrf.mxu0
      %v496 = vadd.f32 %v418, %v495
      %497 = vmatmul.f32.gmra.mxu0 %v434
      %v498 = vpop.f32.mrf.mxu0
      %v499 = vadd.f32 %v418, %v498
      %500 = vmatmul.f32.gmra.mxu0 %v437
      %v501 = vpop.f32.mrf.mxu0
      %v502 = vadd.f32 %v418, %v501
      %503 = vmatmul.f32.gmra.mxu0 %v440
      %v504 = vpop.f32.mrf.mxu0
      %v505 = vadd.f32 %v418, %v504
      %506 = vmatmul.f32.gmra.mxu0 %v443
      %v507 = vpop.f32.mrf.mxu0
      %v508 = vadd.f32 %v418, %v507
      %509 = vmatmul.f32.gmra.mxu0 %v446
      %v510 = vpop.f32.mrf.mxu0
      %v511 = vadd.f32 %v418, %v510
      %512 = vmatmul.f32.gmra.mxu0 %v449
      %v513 = vpop.f32.mrf.mxu0
      %v514 = vadd.f32 %v418, %v513
      %515 = vmatmul.f32.gmra.mxu0 %v452
      %v516 = vpop.f32.mrf.mxu0
      %v517 = vadd.f32 %v418, %v516
      %518 = vmatmul.f32.gmra.mxu0 %v455
      %v519 = vpop.f32.mrf.mxu0
      %v520 = vadd.f32 %v418, %v519
      %521 = vmatmul.f32.gmra.mxu0 %v458
      %v522 = vpop.f32.mrf.mxu0
      %v523 = vadd.f32 %v418, %v522
      %524 = vmatmul.f32.gmra.mxu0 %v461
      %v525 = vpop.f32.mrf.mxu0
      %v526 = vadd.f32 %v418, %v525
      %527 = vmatmul.f32.gmra.mxu0 %v464
      %v528 = vpop.f32.mrf.mxu0
      %v529 = vadd.f32 %v418, %v528
      %530 = vmatmul.f32.gmra.mxu0 %v467
      %v531 = vpop.f32.mrf.mxu0
      %v532 = vadd.f32 %v418, %v531
      %533 = vdwg.mxu0
      %v534 = vmax.f32 %v487, 0.0
      %v535 = vmax.f32 %v490, 0.0
      %v536 = vmax.f32 %v493, 0.0
      %v537 = vmax.f32 %v496, 0.0
      %v538 = vmax.f32 %v499, 0.0
      %v539 = vmax.f32 %v502, 0.0
      %v540 = vmax.f32 %v505, 0.0
      %v541 = vmax.f32 %v508, 0.0
      %v542 = vmax.f32 %v511, 0.0
      %v543 = vmax.f32 %v514, 0.0
      %v544 = vmax.f32 %v517, 0.0
      %v545 = vmax.f32 %v520, 0.0
      %v546 = vmax.f32 %v523, 0.0
      %v547 = vmax.f32 %v526, 0.0
      %v548 = vmax.f32 %v529, 0.0
      %v549 = vmax.f32 %v532, 0.0
      %v550 = vpack.c.bf16 %v535, %v534
      %v551 = vpack.c.bf16 %v537, %v536
      %v552 = vpack.c.bf16 %v539, %v538
      %v553 = vpack.c.bf16 %v541, %v540
      %v554 = vpack.c.bf16 %v543, %v542
      %v555 = vpack.c.bf16 %v545, %v544
      %v556 = vpack.c.bf16 %v547, %v546
      %v557 = vpack.c.bf16 %v549, %v548
      %v558 = vld [vmem:[%s6] sm:$0xff]
      %v559 = vld [vmem:[%s6 + $0x8] sm:$0xff]
      %v560 = vld [vmem:[%s6 + $0x10] sm:$0xff]
      %v561 = vld [vmem:[%s6 + $0x18] sm:$0xff]
      %v562 = vld [vmem:[%s6 + $0x20] sm:$0xff]
      %v563 = vld [vmem:[%s6 + $0x28] sm:$0xff]
      %v564 = vld [vmem:[%s6 + $0x30] sm:$0xff]
      %v565 = vld [vmem:[%s6 + $0x38] sm:$0xff]
      %v566 = vld [vmem:[%s6 + $0x40] sm:$0xff]
      %v567 = vld [vmem:[%s6 + $0x48] sm:$0xff]
      %v568 = vld [vmem:[%s6 + $0x50] sm:$0xff]
      %v569 = vld [vmem:[%s6 + $0x58] sm:$0xff]
      %v570 = vld [vmem:[%s6 + $0x60] sm:$0xff]
      %v571 = vld [vmem:[%s6 + $0x68] sm:$0xff]
      %v572 = vld [vmem:[%s6 + $0x70] sm:$0xff]
      %v573 = vld [vmem:[%s6 + $0x78] sm:$0xff]
      %v590 = vunpack.c.l.b16 %v558
      %v591 = vunpack.c.h.b16 %v558
      %v592 = vunpack.c.l.b16 %v559
      %v593 = vunpack.c.h.b16 %v559
      %v594 = vunpack.c.l.b16 %v560
      %v595 = vunpack.c.h.b16 %v560
      %v596 = vunpack.c.l.b16 %v561
      %v597 = vunpack.c.h.b16 %v561
      %v598 = vunpack.c.l.b16 %v562
      %v599 = vunpack.c.h.b16 %v562
      %v600 = vunpack.c.l.b16 %v563
      %v601 = vunpack.c.h.b16 %v563
      %v602 = vunpack.c.l.b16 %v564
      %v603 = vunpack.c.h.b16 %v564
      %v604 = vunpack.c.l.b16 %v565
      %v605 = vunpack.c.h.b16 %v565
      %v606 = vunpack.c.l.b16 %v566
      %v607 = vunpack.c.h.b16 %v566
      %v608 = vunpack.c.l.b16 %v567
      %v609 = vunpack.c.h.b16 %v567
      %v610 = vunpack.c.l.b16 %v568
      %v611 = vunpack.c.h.b16 %v568
      %v612 = vunpack.c.l.b16 %v569
      %v613 = vunpack.c.h.b16 %v569
      %v614 = vunpack.c.l.b16 %v570
      %v615 = vunpack.c.h.b16 %v570
      %v616 = vunpack.c.l.b16 %v571
      %v617 = vunpack.c.h.b16 %v571
      %v618 = vunpack.c.l.b16 %v572
      %v619 = vunpack.c.h.b16 %v572
      %v620 = vunpack.c.l.b16 %v573
      %v621 = vunpack.c.h.b16 %v573
      %v622 = vpack.c.b16 %v598, %v590
      %v623 = vpack.c.b16 %v599, %v591
      %v624 = vpack.c.b16 %v600, %v592
      %v625 = vpack.c.b16 %v601, %v593
      %v626 = vpack.c.b16 %v602, %v594
      %v627 = vpack.c.b16 %v603, %v595
      %v628 = vpack.c.b16 %v604, %v596
      %v629 = vpack.c.b16 %v605, %v597
      %v630 = vpack.c.b16 %v614, %v606
      %v631 = vpack.c.b16 %v615, %v607
      %v632 = vpack.c.b16 %v616, %v608
      %v633 = vpack.c.b16 %v617, %v609
      %v634 = vpack.c.b16 %v618, %v610
      %v635 = vpack.c.b16 %v619, %v611
      %v636 = vpack.c.b16 %v620, %v612
      %v637 = vpack.c.b16 %v621, %v613
      %vm654 = vcmask 261120
      %v656 = vsel %vm654, %v550, 0
      %v659 = vsel %vm654, %v551, 0
      %v662 = vsel %vm654, %v552, 0
      %v665 = vsel %vm654, %v553, 0
      %v668 = vsel %vm654, %v554, 0
      %v671 = vsel %vm654, %v555, 0
      %v674 = vsel %vm654, %v556, 0
      %v677 = vsel %vm654, %v557, 0
      %679 = vmatpush.bf16.msra.mxu0 0
      %680 = vmatpush.bf16.msra.mxu0 0
      %681 = vmatpush.bf16.msra.mxu0 0
      %682 = vmatpush.bf16.msra.mxu0 0
      %683 = vmatpush.bf16.msra.mxu0 0
      %684 = vmatpush.bf16.msra.mxu0 0
      %685 = vmatpush.bf16.msra.mxu0 %v630
      %686 = vmatpush.bf16.msra.mxu0 %v622
      %687 = vmatmul.bf16.gmra.mxu0 %v656
      %v688 = vpop.f32.mrf.mxu0
      %v689 = vadd.f32 0.0, %v688
      %v690 = vpop.f32.mrf.mxu0
      %v691 = vadd.f32 0.0, %v690
      %692 = vmatmul.bf16.gmra.mxu0 %v659
      %v693 = vpop.f32.mrf.mxu0
      %v694 = vadd.f32 0.0, %v693
      %v695 = vpop.f32.mrf.mxu0
      %v696 = vadd.f32 0.0, %v695
      %697 = vmatmul.bf16.gmra.mxu0 %v662
      %v698 = vpop.f32.mrf.mxu0
      %v699 = vadd.f32 0.0, %v698
      %v700 = vpop.f32.mrf.mxu0
      %v701 = vadd.f32 0.0, %v700
      %702 = vmatmul.bf16.gmra.mxu0 %v665
      %v703 = vpop.f32.mrf.mxu0
      %v704 = vadd.f32 0.0, %v703
      %v705 = vpop.f32.mrf.mxu0
      %v706 = vadd.f32 0.0, %v705
      %707 = vmatmul.bf16.gmra.mxu0 %v668
      %v708 = vpop.f32.mrf.mxu0
      %v709 = vadd.f32 0.0, %v708
      %v710 = vpop.f32.mrf.mxu0
      %v711 = vadd.f32 0.0, %v710
      %712 = vmatmul.bf16.gmra.mxu0 %v671
      %v713 = vpop.f32.mrf.mxu0
      %v714 = vadd.f32 0.0, %v713
      %v715 = vpop.f32.mrf.mxu0
      %v716 = vadd.f32 0.0, %v715
      %717 = vmatmul.bf16.gmra.mxu0 %v674
      %v718 = vpop.f32.mrf.mxu0
      %v719 = vadd.f32 0.0, %v718
      %v720 = vpop.f32.mrf.mxu0
      %v721 = vadd.f32 0.0, %v720
      %722 = vmatmul.bf16.gmra.mxu0 %v677
      %v723 = vpop.f32.mrf.mxu0
      %v724 = vadd.f32 0.0, %v723
      %v725 = vpop.f32.mrf.mxu0
      %v726 = vadd.f32 0.0, %v725
      %727 = vdwg.mxu0
      %728 = vmatpush.bf16.msra.mxu0 0
      %729 = vmatpush.bf16.msra.mxu0 0
      %730 = vmatpush.bf16.msra.mxu0 0
      %731 = vmatpush.bf16.msra.mxu0 0
      %732 = vmatpush.bf16.msra.mxu0 0
      %733 = vmatpush.bf16.msra.mxu0 0
      %734 = vmatpush.bf16.msra.mxu0 %v631
      %735 = vmatpush.bf16.msra.mxu0 %v623
      %736 = vmatmul.bf16.gmra.mxu0 %v656
      %v737 = vpop.f32.mrf.mxu0
      %v738 = vadd.f32 0.0, %v737
      %v739 = vpop.f32.mrf.mxu0
      %v740 = vadd.f32 0.0, %v739
      %741 = vmatmul.bf16.gmra.mxu0 %v659
      %v742 = vpop.f32.mrf.mxu0
      %v743 = vadd.f32 0.0, %v742
      %v744 = vpop.f32.mrf.mxu0
      %v745 = vadd.f32 0.0, %v744
      %746 = vmatmul.bf16.gmra.mxu0 %v662
      %v747 = vpop.f32.mrf.mxu0
      %v748 = vadd.f32 0.0, %v747
      %v749 = vpop.f32.mrf.mxu0
      %v750 = vadd.f32 0.0, %v749
      %751 = vmatmul.bf16.gmra.mxu0 %v665
      %v752 = vpop.f32.mrf.mxu0
      %v753 = vadd.f32 0.0, %v752
      %v754 = vpop.f32.mrf.mxu0
      %v755 = vadd.f32 0.0, %v754
      %756 = vmatmul.bf16.gmra.mxu0 %v668
      %v757 = vpop.f32.mrf.mxu0
      %v758 = vadd.f32 0.0, %v757
      %v759 = vpop.f32.mrf.mxu0
      %v760 = vadd.f32 0.0, %v759
      %761 = vmatmul.bf16.gmra.mxu0 %v671
      %v762 = vpop.f32.mrf.mxu0
      %v763 = vadd.f32 0.0, %v762
      %v764 = vpop.f32.mrf.mxu0
      %v765 = vadd.f32 0.0, %v764
      %766 = vmatmul.bf16.gmra.mxu0 %v674
      %v767 = vpop.f32.mrf.mxu0
      %v768 = vadd.f32 0.0, %v767
      %v769 = vpop.f32.mrf.mxu0
      %v770 = vadd.f32 0.0, %v769
      %771 = vmatmul.bf16.gmra.mxu0 %v677
      %v772 = vpop.f32.mrf.mxu0
      %v773 = vadd.f32 0.0, %v772
      %v774 = vpop.f32.mrf.mxu0
      %v775 = vadd.f32 0.0, %v774
      %776 = vdwg.mxu0
      %777 = vmatpush.bf16.msra.mxu0 0
      %778 = vmatpush.bf16.msra.mxu0 0
      %779 = vmatpush.bf16.msra.mxu0 0
      %780 = vmatpush.bf16.msra.mxu0 0
      %781 = vmatpush.bf16.msra.mxu0 0
      %782 = vmatpush.bf16.msra.mxu0 0
      %783 = vmatpush.bf16.msra.mxu0 %v632
      %784 = vmatpush.bf16.msra.mxu0 %v624
      %785 = vmatmul.bf16.gmra.mxu0 %v656
      %v786 = vpop.f32.mrf.mxu0
      %v787 = vadd.f32 0.0, %v786
      %v788 = vpop.f32.mrf.mxu0
      %v789 = vadd.f32 0.0, %v788
      %790 = vmatmul.bf16.gmra.mxu0 %v659
      %v791 = vpop.f32.mrf.mxu0
      %v792 = vadd.f32 0.0, %v791
      %v793 = vpop.f32.mrf.mxu0
      %v794 = vadd.f32 0.0, %v793
      %795 = vmatmul.bf16.gmra.mxu0 %v662
      %v796 = vpop.f32.mrf.mxu0
      %v797 = vadd.f32 0.0, %v796
      %v798 = vpop.f32.mrf.mxu0
      %v799 = vadd.f32 0.0, %v798
      %800 = vmatmul.bf16.gmra.mxu0 %v665
      %v801 = vpop.f32.mrf.mxu0
      %v802 = vadd.f32 0.0, %v801
      %v803 = vpop.f32.mrf.mxu0
      %v804 = vadd.f32 0.0, %v803
      %805 = vmatmul.bf16.gmra.mxu0 %v668
      %v806 = vpop.f32.mrf.mxu0
      %v807 = vadd.f32 0.0, %v806
      %v808 = vpop.f32.mrf.mxu0
      %v809 = vadd.f32 0.0, %v808
      %810 = vmatmul.bf16.gmra.mxu0 %v671
      %v811 = vpop.f32.mrf.mxu0
      %v812 = vadd.f32 0.0, %v811
      %v813 = vpop.f32.mrf.mxu0
      %v814 = vadd.f32 0.0, %v813
      %815 = vmatmul.bf16.gmra.mxu0 %v674
      %v816 = vpop.f32.mrf.mxu0
      %v817 = vadd.f32 0.0, %v816
      %v818 = vpop.f32.mrf.mxu0
      %v819 = vadd.f32 0.0, %v818
      %820 = vmatmul.bf16.gmra.mxu0 %v677
      %v821 = vpop.f32.mrf.mxu0
      %v822 = vadd.f32 0.0, %v821
      %v823 = vpop.f32.mrf.mxu0
      %v824 = vadd.f32 0.0, %v823
      %825 = vdwg.mxu0
      %826 = vmatpush.bf16.msra.mxu0 0
      %827 = vmatpush.bf16.msra.mxu0 0
      %828 = vmatpush.bf16.msra.mxu0 0
      %829 = vmatpush.bf16.msra.mxu0 0
      %830 = vmatpush.bf16.msra.mxu0 0
      %831 = vmatpush.bf16.msra.mxu0 0
      %832 = vmatpush.bf16.msra.mxu0 %v633
      %833 = vmatpush.bf16.msra.mxu0 %v625
      %834 = vmatmul.bf16.gmra.mxu0 %v656
      %v835 = vpop.f32.mrf.mxu0
      %v836 = vadd.f32 0.0, %v835
      %v837 = vpop.f32.mrf.mxu0
      %v838 = vadd.f32 0.0, %v837
      %839 = vmatmul.bf16.gmra.mxu0 %v659
      %v840 = vpop.f32.mrf.mxu0
      %v841 = vadd.f32 0.0, %v840
      %v842 = vpop.f32.mrf.mxu0
      %v843 = vadd.f32 0.0, %v842
      %844 = vmatmul.bf16.gmra.mxu0 %v662
      %v845 = vpop.f32.mrf.mxu0
      %v846 = vadd.f32 0.0, %v845
      %v847 = vpop.f32.mrf.mxu0
      %v848 = vadd.f32 0.0, %v847
      %849 = vmatmul.bf16.gmra.mxu0 %v665
      %v850 = vpop.f32.mrf.mxu0
      %v851 = vadd.f32 0.0, %v850
      %v852 = vpop.f32.mrf.mxu0
      %v853 = vadd.f32 0.0, %v852
      %854 = vmatmul.bf16.gmra.mxu0 %v668
      %v855 = vpop.f32.mrf.mxu0
      %v856 = vadd.f32 0.0, %v855
      %v857 = vpop.f32.mrf.mxu0
      %v858 = vadd.f32 0.0, %v857
      %859 = vmatmul.bf16.gmra.mxu0 %v671
      %v860 = vpop.f32.mrf.mxu0
      %v861 = vadd.f32 0.0, %v860
      %v862 = vpop.f32.mrf.mxu0
      %v863 = vadd.f32 0.0, %v862
      %864 = vmatmul.bf16.gmra.mxu0 %v674
      %v865 = vpop.f32.mrf.mxu0
      %v866 = vadd.f32 0.0, %v865
      %v867 = vpop.f32.mrf.mxu0
      %v868 = vadd.f32 0.0, %v867
      %869 = vmatmul.bf16.gmra.mxu0 %v677
      %v870 = vpop.f32.mrf.mxu0
      %v871 = vadd.f32 0.0, %v870
      %v872 = vpop.f32.mrf.mxu0
      %v873 = vadd.f32 0.0, %v872
      %874 = vdwg.mxu0
      %875 = vmatpush.bf16.msra.mxu0 0
      %876 = vmatpush.bf16.msra.mxu0 0
      %877 = vmatpush.bf16.msra.mxu0 0
      %878 = vmatpush.bf16.msra.mxu0 0
      %879 = vmatpush.bf16.msra.mxu0 0
      %880 = vmatpush.bf16.msra.mxu0 0
      %881 = vmatpush.bf16.msra.mxu0 %v634
      %882 = vmatpush.bf16.msra.mxu0 %v626
      %883 = vmatmul.bf16.gmra.mxu0 %v656
      %v884 = vpop.f32.mrf.mxu0
      %v885 = vadd.f32 0.0, %v884
      %v886 = vpop.f32.mrf.mxu0
      %v887 = vadd.f32 0.0, %v886
      %888 = vmatmul.bf16.gmra.mxu0 %v659
      %v889 = vpop.f32.mrf.mxu0
      %v890 = vadd.f32 0.0, %v889
      %v891 = vpop.f32.mrf.mxu0
      %v892 = vadd.f32 0.0, %v891
      %893 = vmatmul.bf16.gmra.mxu0 %v662
      %v894 = vpop.f32.mrf.mxu0
      %v895 = vadd.f32 0.0, %v894
      %v896 = vpop.f32.mrf.mxu0
      %v897 = vadd.f32 0.0, %v896
      %898 = vmatmul.bf16.gmra.mxu0 %v665
      %v899 = vpop.f32.mrf.mxu0
      %v900 = vadd.f32 0.0, %v899
      %v901 = vpop.f32.mrf.mxu0
      %v902 = vadd.f32 0.0, %v901
      %903 = vmatmul.bf16.gmra.mxu0 %v668
      %v904 = vpop.f32.mrf.mxu0
      %v905 = vadd.f32 0.0, %v904
      %v906 = vpop.f32.mrf.mxu0
      %v907 = vadd.f32 0.0, %v906
      %908 = vmatmul.bf16.gmra.mxu0 %v671
      %v909 = vpop.f32.mrf.mxu0
      %v910 = vadd.f32 0.0, %v909
      %v911 = vpop.f32.mrf.mxu0
      %v912 = vadd.f32 0.0, %v911
      %913 = vmatmul.bf16.gmra.mxu0 %v674
      %v914 = vpop.f32.mrf.mxu0
      %v915 = vadd.f32 0.0, %v914
      %v916 = vpop.f32.mrf.mxu0
      %v917 = vadd.f32 0.0, %v916
      %918 = vmatmul.bf16.gmra.mxu0 %v677
      %v919 = vpop.f32.mrf.mxu0
      %v920 = vadd.f32 0.0, %v919
      %v921 = vpop.f32.mrf.mxu0
      %v922 = vadd.f32 0.0, %v921
      %923 = vdwg.mxu0
      %924 = vmatpush.bf16.msra.mxu0 0
      %925 = vmatpush.bf16.msra.mxu0 0
      %926 = vmatpush.bf16.msra.mxu0 0
      %927 = vmatpush.bf16.msra.mxu0 0
      %928 = vmatpush.bf16.msra.mxu0 0
      %929 = vmatpush.bf16.msra.mxu0 0
      %930 = vmatpush.bf16.msra.mxu0 %v635
      %931 = vmatpush.bf16.msra.mxu0 %v627
      %932 = vmatmul.bf16.gmra.mxu0 %v656
      %v933 = vpop.f32.mrf.mxu0
      %v934 = vadd.f32 0.0, %v933
      %v935 = vpop.f32.mrf.mxu0
      %v936 = vadd.f32 0.0, %v935
      %937 = vmatmul.bf16.gmra.mxu0 %v659
      %v938 = vpop.f32.mrf.mxu0
      %v939 = vadd.f32 0.0, %v938
      %v940 = vpop.f32.mrf.mxu0
      %v941 = vadd.f32 0.0, %v940
      %942 = vmatmul.bf16.gmra.mxu0 %v662
      %v943 = vpop.f32.mrf.mxu0
      %v944 = vadd.f32 0.0, %v943
      %v945 = vpop.f32.mrf.mxu0
      %v946 = vadd.f32 0.0, %v945
      %947 = vmatmul.bf16.gmra.mxu0 %v665
      %v948 = vpop.f32.mrf.mxu0
      %v949 = vadd.f32 0.0, %v948
      %v950 = vpop.f32.mrf.mxu0
      %v951 = vadd.f32 0.0, %v950
      %952 = vmatmul.bf16.gmra.mxu0 %v668
      %v953 = vpop.f32.mrf.mxu0
      %v954 = vadd.f32 0.0, %v953
      %v955 = vpop.f32.mrf.mxu0
      %v956 = vadd.f32 0.0, %v955
      %957 = vmatmul.bf16.gmra.mxu0 %v671
      %v958 = vpop.f32.mrf.mxu0
      %v959 = vadd.f32 0.0, %v958
      %v960 = vpop.f32.mrf.mxu0
      %v961 = vadd.f32 0.0, %v960
      %962 = vmatmul.bf16.gmra.mxu0 %v674
      %v963 = vpop.f32.mrf.mxu0
      %v964 = vadd.f32 0.0, %v963
      %v965 = vpop.f32.mrf.mxu0
      %v966 = vadd.f32 0.0, %v965
      %967 = vmatmul.bf16.gmra.mxu0 %v677
      %v968 = vpop.f32.mrf.mxu0
      %v969 = vadd.f32 0.0, %v968
      %v970 = vpop.f32.mrf.mxu0
      %v971 = vadd.f32 0.0, %v970
      %972 = vdwg.mxu0
      %973 = vmatpush.bf16.msra.mxu0 0
      %974 = vmatpush.bf16.msra.mxu0 0
      %975 = vmatpush.bf16.msra.mxu0 0
      %976 = vmatpush.bf16.msra.mxu0 0
      %977 = vmatpush.bf16.msra.mxu0 0
      %978 = vmatpush.bf16.msra.mxu0 0
      %979 = vmatpush.bf16.msra.mxu0 %v636
      %980 = vmatpush.bf16.msra.mxu0 %v628
      %981 = vmatmul.bf16.gmra.mxu0 %v656
      %v982 = vpop.f32.mrf.mxu0
      %v983 = vadd.f32 0.0, %v982
      %v984 = vpop.f32.mrf.mxu0
      %v985 = vadd.f32 0.0, %v984
      %986 = vmatmul.bf16.gmra.mxu0 %v659
      %v987 = vpop.f32.mrf.mxu0
      %v988 = vadd.f32 0.0, %v987
      %v989 = vpop.f32.mrf.mxu0
      %v990 = vadd.f32 0.0, %v989
      %991 = vmatmul.bf16.gmra.mxu0 %v662
      %v992 = vpop.f32.mrf.mxu0
      %v993 = vadd.f32 0.0, %v992
      %v994 = vpop.f32.mrf.mxu0
      %v995 = vadd.f32 0.0, %v994
      %996 = vmatmul.bf16.gmra.mxu0 %v665
      %v997 = vpop.f32.mrf.mxu0
      %v998 = vadd.f32 0.0, %v997
      %v999 = vpop.f32.mrf.mxu0
      %v1000 = vadd.f32 0.0, %v999
      %1001 = vmatmul.bf16.gmra.mxu0 %v668
      %v1002 = vpop.f32.mrf.mxu0
      %v1003 = vadd.f32 0.0, %v1002
      %v1004 = vpop.f32.mrf.mxu0
      %v1005 = vadd.f32 0.0, %v1004
      %1006 = vmatmul.bf16.gmra.mxu0 %v671
      %v1007 = vpop.f32.mrf.mxu0
      %v1008 = vadd.f32 0.0, %v1007
      %v1009 = vpop.f32.mrf.mxu0
      %v1010 = vadd.f32 0.0, %v1009
      %1011 = vmatmul.bf16.gmra.mxu0 %v674
      %v1012 = vpop.f32.mrf.mxu0
      %v1013 = vadd.f32 0.0, %v1012
      %v1014 = vpop.f32.mrf.mxu0
      %v1015 = vadd.f32 0.0, %v1014
      %1016 = vmatmul.bf16.gmra.mxu0 %v677
      %v1017 = vpop.f32.mrf.mxu0
      %v1018 = vadd.f32 0.0, %v1017
      %v1019 = vpop.f32.mrf.mxu0
      %v1020 = vadd.f32 0.0, %v1019
      %1021 = vdwg.mxu0
      %1022 = vmatpush.bf16.msra.mxu0 0
      %1023 = vmatpush.bf16.msra.mxu0 0
      %1024 = vmatpush.bf16.msra.mxu0 0
      %1025 = vmatpush.bf16.msra.mxu0 0
      %1026 = vmatpush.bf16.msra.mxu0 0
      %1027 = vmatpush.bf16.msra.mxu0 0
      %1028 = vmatpush.bf16.msra.mxu0 %v637
      %1029 = vmatpush.bf16.msra.mxu0 %v629
      %1030 = vmatmul.bf16.gmra.mxu0 %v656
      %v1031 = vpop.f32.mrf.mxu0
      %v1032 = vadd.f32 0.0, %v1031
      %v1033 = vpop.f32.mrf.mxu0
      %v1034 = vadd.f32 0.0, %v1033
      %1035 = vmatmul.bf16.gmra.mxu0 %v659
      %v1036 = vpop.f32.mrf.mxu0
      %v1037 = vadd.f32 0.0, %v1036
      %v1038 = vpop.f32.mrf.mxu0
      %v1039 = vadd.f32 0.0, %v1038
      %1040 = vmatmul.bf16.gmra.mxu0 %v662
      %v1041 = vpop.f32.mrf.mxu0
      %v1042 = vadd.f32 0.0, %v1041
      %v1043 = vpop.f32.mrf.mxu0
      %v1044 = vadd.f32 0.0, %v1043
      %1045 = vmatmul.bf16.gmra.mxu0 %v665
      %v1046 = vpop.f32.mrf.mxu0
      %v1047 = vadd.f32 0.0, %v1046
      %v1048 = vpop.f32.mrf.mxu0
      %v1049 = vadd.f32 0.0, %v1048
      %1050 = vmatmul.bf16.gmra.mxu0 %v668
      %v1051 = vpop.f32.mrf.mxu0
      %v1052 = vadd.f32 0.0, %v1051
      %v1053 = vpop.f32.mrf.mxu0
      %v1054 = vadd.f32 0.0, %v1053
      %1055 = vmatmul.bf16.gmra.mxu0 %v671
      %v1056 = vpop.f32.mrf.mxu0
      %v1057 = vadd.f32 0.0, %v1056
      %v1058 = vpop.f32.mrf.mxu0
      %v1059 = vadd.f32 0.0, %v1058
      %1060 = vmatmul.bf16.gmra.mxu0 %v674
      %v1061 = vpop.f32.mrf.mxu0
      %v1062 = vadd.f32 0.0, %v1061
      %v1063 = vpop.f32.mrf.mxu0
      %v1064 = vadd.f32 0.0, %v1063
      %1065 = vmatmul.bf16.gmra.mxu0 %v677
      %v1066 = vpop.f32.mrf.mxu0
      %v1067 = vadd.f32 0.0, %v1066
      %v1068 = vpop.f32.mrf.mxu0
      %v1069 = vadd.f32 0.0, %v1068
      %1070 = vdwg.mxu0
      %v1071 = vlaneseq
      %v1072 = vand.u32 %v1071, 127
      %v1073 = vld [vmem:[%s376] sm:$0xff]
      %v1074 = vld [vmem:[%s376 + $0x8] sm:$0xff]
      %v1075 = vld [vmem:[%s376 + $0x10] sm:$0xff]
      %v1076 = vld [vmem:[%s376 + $0x18] sm:$0xff]
      %v1077 = vld [vmem:[%s376 + $0x20] sm:$0xff]
      %v1078 = vld [vmem:[%s376 + $0x28] sm:$0xff]
      %v1079 = vld [vmem:[%s376 + $0x30] sm:$0xff]
      %v1080 = vld [vmem:[%s376 + $0x38] sm:$0xff]
      %v1081 = vld [vmem:[%s376 + $0x40] sm:$0xff]
      %v1082 = vld [vmem:[%s376 + $0x48] sm:$0xff]
      %v1083 = vld [vmem:[%s376 + $0x50] sm:$0xff]
      %v1084 = vld [vmem:[%s376 + $0x58] sm:$0xff]
      %v1085 = vld [vmem:[%s376 + $0x60] sm:$0xff]
      %v1086 = vld [vmem:[%s376 + $0x68] sm:$0xff]
      %v1087 = vld [vmem:[%s376 + $0x70] sm:$0xff]
      %v1088 = vld [vmem:[%s376 + $0x78] sm:$0xff]
      %1089 = vset.pattern.permute.xlu0 0
      %1090 = vperm.xlu0 %1089, %v1073
      %v1091 = vpop.permute.xlu0 %1090
      %1092 = vset.pattern.permute.xlu0 0
      %1093 = vperm.xlu0 %1092, %v1074
      %v1094 = vpop.permute.xlu0 %1093
      %1095 = vset.pattern.permute.xlu0 0
      %1096 = vperm.xlu0 %1095, %v1075
      %v1097 = vpop.permute.xlu0 %1096
      %1098 = vset.pattern.permute.xlu0 0
      %1099 = vperm.xlu0 %1098, %v1076
      %v1100 = vpop.permute.xlu0 %1099
      %1101 = vset.pattern.permute.xlu0 0
      %1102 = vperm.xlu0 %1101, %v1077
      %v1103 = vpop.permute.xlu0 %1102
      %1104 = vset.pattern.permute.xlu0 0
      %1105 = vperm.xlu0 %1104, %v1078
      %v1106 = vpop.permute.xlu0 %1105
      %1107 = vset.pattern.permute.xlu0 0
      %1108 = vperm.xlu0 %1107, %v1079
      %v1109 = vpop.permute.xlu0 %1108
      %1110 = vset.pattern.permute.xlu0 0
      %1111 = vperm.xlu0 %1110, %v1080
      %v1112 = vpop.permute.xlu0 %1111
      %1113 = vset.pattern.permute.xlu0 0
      %1114 = vperm.xlu0 %1113, %v1081
      %v1115 = vpop.permute.xlu0 %1114
      %1116 = vset.pattern.permute.xlu0 0
      %1117 = vperm.xlu0 %1116, %v1082
      %v1118 = vpop.permute.xlu0 %1117
      %1119 = vset.pattern.permute.xlu0 0
      %1120 = vperm.xlu0 %1119, %v1083
      %v1121 = vpop.permute.xlu0 %1120
      %1122 = vset.pattern.permute.xlu0 0
      %1123 = vperm.xlu0 %1122, %v1084
      %v1124 = vpop.permute.xlu0 %1123
      %1125 = vset.pattern.permute.xlu0 0
      %1126 = vperm.xlu0 %1125, %v1085
      %v1127 = vpop.permute.xlu0 %1126
      %1128 = vset.pattern.permute.xlu0 0
      %1129 = vperm.xlu0 %1128, %v1086
      %v1130 = vpop.permute.xlu0 %1129
      %1131 = vset.pattern.permute.xlu0 0
      %1132 = vperm.xlu0 %1131, %v1087
      %v1133 = vpop.permute.xlu0 %1132
      %1134 = vset.pattern.permute.xlu0 0
      %1135 = vperm.xlu0 %1134, %v1088
      %v1136 = vpop.permute.xlu0 %1135
      %vm1137 = vcmp.eq.s32.totalorder %v1072, %v1091
      %vm1138 = vcmp.eq.s32.totalorder %v1072, %v1094
      %vm1139 = vcmp.eq.s32.totalorder %v1072, %v1097
      %vm1140 = vcmp.eq.s32.totalorder %v1072, %v1100
      %vm1141 = vcmp.eq.s32.totalorder %v1072, %v1103
      %vm1142 = vcmp.eq.s32.totalorder %v1072, %v1106
      %vm1143 = vcmp.eq.s32.totalorder %v1072, %v1109
      %vm1144 = vcmp.eq.s32.totalorder %v1072, %v1112
      %vm1145 = vcmp.eq.s32.totalorder %v1072, %v1115
      %vm1146 = vcmp.eq.s32.totalorder %v1072, %v1118
      %vm1147 = vcmp.eq.s32.totalorder %v1072, %v1121
      %vm1148 = vcmp.eq.s32.totalorder %v1072, %v1124
      %vm1149 = vcmp.eq.s32.totalorder %v1072, %v1127
      %vm1150 = vcmp.eq.s32.totalorder %v1072, %v1130
      %vm1151 = vcmp.eq.s32.totalorder %v1072, %v1133
      %vm1152 = vcmp.eq.s32.totalorder %v1072, %v1136
      %v1153 = vsel %vm1137, 1, 0
      %v1154 = vsel %vm1138, 1, 0
      %v1155 = vsel %vm1139, 1, 0
      %v1156 = vsel %vm1140, 1, 0
      %v1157 = vsel %vm1141, 1, 0
      %v1158 = vsel %vm1142, 1, 0
      %v1159 = vsel %vm1143, 1, 0
      %v1160 = vsel %vm1144, 1, 0
      %v1161 = vsel %vm1145, 1, 0
      %v1162 = vsel %vm1146, 1, 0
      %v1163 = vsel %vm1147, 1, 0
      %v1164 = vsel %vm1148, 1, 0
      %v1165 = vsel %vm1149, 1, 0
      %v1166 = vsel %vm1150, 1, 0
      %v1167 = vsel %vm1151, 1, 0
      %v1168 = vsel %vm1152, 1, 0
      %v1169 = vcvt.s32.f32 %v1153
      %v1170 = vcvt.s32.f32 %v1154
      %v1171 = vcvt.s32.f32 %v1155
      %v1172 = vcvt.s32.f32 %v1156
      %v1173 = vcvt.s32.f32 %v1157
      %v1174 = vcvt.s32.f32 %v1158
      %v1175 = vcvt.s32.f32 %v1159
      %v1176 = vcvt.s32.f32 %v1160
      %v1177 = vcvt.s32.f32 %v1161
      %v1178 = vcvt.s32.f32 %v1162
      %v1179 = vcvt.s32.f32 %v1163
      %v1180 = vcvt.s32.f32 %v1164
      %v1181 = vcvt.s32.f32 %v1165
      %v1182 = vcvt.s32.f32 %v1166
      %v1183 = vcvt.s32.f32 %v1167
      %v1184 = vcvt.s32.f32 %v1168
      %v1185 = vpack.c.bf16 %v1170, %v1169
      %v1186 = vpack.c.bf16 %v1172, %v1171
      %v1187 = vpack.c.bf16 %v1174, %v1173
      %v1188 = vpack.c.bf16 %v1176, %v1175
      %v1189 = vpack.c.bf16 %v1178, %v1177
      %v1190 = vpack.c.bf16 %v1180, %v1179
      %v1191 = vpack.c.bf16 %v1182, %v1181
      %v1192 = vpack.c.bf16 %v1184, %v1183
      %v1193 = vld [vmem:[%s0] sm:$0xf]
      %v1194 = vld [vmem:[%s0 + $0x4] sm:$0xf]
      %v1195 = vld [vmem:[%s0 + $0x8] sm:$0xf]
      %v1196 = vld [vmem:[%s0 + $0xc] sm:$0xf]
      %v1197 = vld [vmem:[%s0 + $0x10] sm:$0xf]
      %v1198 = vld [vmem:[%s0 + $0x14] sm:$0xf]
      %v1199 = vld [vmem:[%s0 + $0x18] sm:$0xf]
      %v1200 = vld [vmem:[%s0 + $0x1c] sm:$0xf]
      %v1209 = vunpack.c.l.b16 %v1193
      %v1210 = vunpack.c.l.b16 %v1194
      %v1211 = vunpack.c.l.b16 %v1195
      %v1212 = vunpack.c.l.b16 %v1196
      %v1213 = vunpack.c.l.b16 %v1197
      %v1214 = vunpack.c.l.b16 %v1198
      %v1215 = vunpack.c.l.b16 %v1199
      %v1216 = vunpack.c.l.b16 %v1200
      %v1217 = vpack.c.b16 %v1210, %v1209
      %v1218 = vpack.c.b16 %v1212, %v1211
      %v1219 = vpack.c.b16 %v1214, %v1213
      %v1220 = vpack.c.b16 %v1216, %v1215
      %vm1225 = vcmask 523264
      %v1227 = vsel %vm1225, %v1185, 0
      %v1230 = vsel %vm1225, %v1186, 0
      %v1233 = vsel %vm1225, %v1187, 0
      %v1236 = vsel %vm1225, %v1188, 0
      %v1239 = vsel %vm1225, %v1189, 0
      %v1242 = vsel %vm1225, %v1190, 0
      %v1245 = vsel %vm1225, %v1191, 0
      %v1248 = vsel %vm1225, %v1192, 0
      %1250 = vmatpush.bf16.msra.mxu0 0
      %1251 = vmatpush.bf16.msra.mxu0 0
      %1252 = vmatpush.bf16.msra.mxu0 0
      %1253 = vmatpush.bf16.msra.mxu0 0
      %1254 = vmatpush.bf16.msra.mxu0 %v1220
      %1255 = vmatpush.bf16.msra.mxu0 %v1219
      %1256 = vmatpush.bf16.msra.mxu0 %v1218
      %1257 = vmatpush.bf16.msra.mxu0 %v1217
      %1258 = vmatmul.bf16.gmra.mxu0 %v1227
      %v1259 = vpop.f32.mrf.mxu0
      %v1260 = vadd.f32 0.0, %v1259
      %v1261 = vpop.f32.mrf.mxu0
      %v1262 = vadd.f32 0.0, %v1261
      %1263 = vmatmul.bf16.gmra.mxu0 %v1230
      %v1264 = vpop.f32.mrf.mxu0
      %v1265 = vadd.f32 0.0, %v1264
      %v1266 = vpop.f32.mrf.mxu0
      %v1267 = vadd.f32 0.0, %v1266
      %1268 = vmatmul.bf16.gmra.mxu0 %v1233
      %v1269 = vpop.f32.mrf.mxu0
      %v1270 = vadd.f32 0.0, %v1269
      %v1271 = vpop.f32.mrf.mxu0
      %v1272 = vadd.f32 0.0, %v1271
      %1273 = vmatmul.bf16.gmra.mxu0 %v1236
      %v1274 = vpop.f32.mrf.mxu0
      %v1275 = vadd.f32 0.0, %v1274
      %v1276 = vpop.f32.mrf.mxu0
      %v1277 = vadd.f32 0.0, %v1276
      %1278 = vmatmul.bf16.gmra.mxu0 %v1239
      %v1279 = vpop.f32.mrf.mxu0
      %v1280 = vadd.f32 0.0, %v1279
      %v1281 = vpop.f32.mrf.mxu0
      %v1282 = vadd.f32 0.0, %v1281
      %1283 = vmatmul.bf16.gmra.mxu0 %v1242
      %v1284 = vpop.f32.mrf.mxu0
      %v1285 = vadd.f32 0.0, %v1284
      %v1286 = vpop.f32.mrf.mxu0
      %v1287 = vadd.f32 0.0, %v1286
      %1288 = vmatmul.bf16.gmra.mxu0 %v1245
      %v1289 = vpop.f32.mrf.mxu0
      %v1290 = vadd.f32 0.0, %v1289
      %v1291 = vpop.f32.mrf.mxu0
      %v1292 = vadd.f32 0.0, %v1291
      %1293 = vmatmul.bf16.gmra.mxu0 %v1248
      %v1294 = vpop.f32.mrf.mxu0
      %v1295 = vadd.f32 0.0, %v1294
      %v1296 = vpop.f32.mrf.mxu0
      %v1297 = vadd.f32 0.0, %v1296
      %1298 = vdwg.mxu0
      %v1299 = vpack.c.bf16 %v1262, %v1260
      %v1300 = vpack.c.bf16 %v1267, %v1265
      %v1301 = vpack.c.bf16 %v1272, %v1270
      %v1302 = vpack.c.bf16 %v1277, %v1275
      %v1303 = vpack.c.bf16 %v1282, %v1280
      %v1304 = vpack.c.bf16 %v1287, %v1285
      %v1305 = vpack.c.bf16 %v1292, %v1290
      %v1306 = vpack.c.bf16 %v1297, %v1295
      %v1307 = vld [vmem:[%s7] sm:$0xff]
      %v1308 = vld [vmem:[%s7 + $0x8] sm:$0xff]
      %v1309 = vld [vmem:[%s7 + $0x10] sm:$0xff]
      %v1310 = vld [vmem:[%s7 + $0x18] sm:$0xff]
      %v1311 = vld [vmem:[%s7 + $0x20] sm:$0xff]
      %v1312 = vld [vmem:[%s7 + $0x28] sm:$0xff]
      %v1313 = vld [vmem:[%s7 + $0x30] sm:$0xff]
      %v1314 = vld [vmem:[%s7 + $0x38] sm:$0xff]
      %v1315 = vld [vmem:[%s7 + $0x40] sm:$0xff]
      %v1316 = vld [vmem:[%s7 + $0x48] sm:$0xff]
      %v1317 = vld [vmem:[%s7 + $0x50] sm:$0xff]
      %v1318 = vld [vmem:[%s7 + $0x58] sm:$0xff]
      %v1319 = vld [vmem:[%s7 + $0x60] sm:$0xff]
      %v1320 = vld [vmem:[%s7 + $0x68] sm:$0xff]
      %v1321 = vld [vmem:[%s7 + $0x70] sm:$0xff]
      %v1322 = vld [vmem:[%s7 + $0x78] sm:$0xff]
      %v1339 = vunpack.c.l.b16 %v1307
      %v1340 = vunpack.c.h.b16 %v1307
      %v1341 = vunpack.c.l.b16 %v1308
      %v1342 = vunpack.c.h.b16 %v1308
      %v1343 = vunpack.c.l.b16 %v1309
      %v1344 = vunpack.c.h.b16 %v1309
      %v1345 = vunpack.c.l.b16 %v1310
      %v1346 = vunpack.c.h.b16 %v1310
      %v1347 = vunpack.c.l.b16 %v1311
      %v1348 = vunpack.c.h.b16 %v1311
      %v1349 = vunpack.c.l.b16 %v1312
      %v1350 = vunpack.c.h.b16 %v1312
      %v1351 = vunpack.c.l.b16 %v1313
      %v1352 = vunpack.c.h.b16 %v1313
      %v1353 = vunpack.c.l.b16 %v1314
      %v1354 = vunpack.c.h.b16 %v1314
      %v1355 = vunpack.c.l.b16 %v1315
      %v1356 = vunpack.c.h.b16 %v1315
      %v1357 = vunpack.c.l.b16 %v1316
      %v1358 = vunpack.c.h.b16 %v1316
      %v1359 = vunpack.c.l.b16 %v1317
      %v1360 = vunpack.c.h.b16 %v1317
      %v1361 = vunpack.c.l.b16 %v1318
      %v1362 = vunpack.c.h.b16 %v1318
      %v1363 = vunpack.c.l.b16 %v1319
      %v1364 = vunpack.c.h.b16 %v1319
      %v1365 = vunpack.c.l.b16 %v1320
      %v1366 = vunpack.c.h.b16 %v1320
      %v1367 = vunpack.c.l.b16 %v1321
      %v1368 = vunpack.c.h.b16 %v1321
      %v1369 = vunpack.c.l.b16 %v1322
      %v1370 = vunpack.c.h.b16 %v1322
      %v1371 = vpack.c.b16 %v1347, %v1339
      %v1372 = vpack.c.b16 %v1348, %v1340
      %v1373 = vpack.c.b16 %v1349, %v1341
      %v1374 = vpack.c.b16 %v1350, %v1342
      %v1375 = vpack.c.b16 %v1351, %v1343
      %v1376 = vpack.c.b16 %v1352, %v1344
      %v1377 = vpack.c.b16 %v1353, %v1345
      %v1378 = vpack.c.b16 %v1354, %v1346
      %v1379 = vpack.c.b16 %v1363, %v1355
      %v1380 = vpack.c.b16 %v1364, %v1356
      %v1381 = vpack.c.b16 %v1365, %v1357
      %v1382 = vpack.c.b16 %v1366, %v1358
      %v1383 = vpack.c.b16 %v1367, %v1359
      %v1384 = vpack.c.b16 %v1368, %v1360
      %v1385 = vpack.c.b16 %v1369, %v1361
      %v1386 = vpack.c.b16 %v1370, %v1362
      %v1404 = vsel %vm654, %v1299, 0
      %v1407 = vsel %vm654, %v1300, 0
      %v1410 = vsel %vm654, %v1301, 0
      %v1413 = vsel %vm654, %v1302, 0
      %v1416 = vsel %vm654, %v1303, 0
      %v1419 = vsel %vm654, %v1304, 0
      %v1422 = vsel %vm654, %v1305, 0
      %v1425 = vsel %vm654, %v1306, 0
      %1427 = vmatpush.bf16.msra.mxu0 0
      %1428 = vmatpush.bf16.msra.mxu0 0
      %1429 = vmatpush.bf16.msra.mxu0 0
      %1430 = vmatpush.bf16.msra.mxu0 0
      %1431 = vmatpush.bf16.msra.mxu0 0
      %1432 = vmatpush.bf16.msra.mxu0 0
      %1433 = vmatpush.bf16.msra.mxu0 %v1379
      %1434 = vmatpush.bf16.msra.mxu0 %v1371
      %1435 = vmatmul.bf16.gmra.mxu0 %v1404
      %v1436 = vpop.f32.mrf.mxu0
      %v1437 = vadd.f32 0.0, %v1436
      %v1438 = vpop.f32.mrf.mxu0
      %v1439 = vadd.f32 0.0, %v1438
      %1440 = vmatmul.bf16.gmra.mxu0 %v1407
      %v1441 = vpop.f32.mrf.mxu0
      %v1442 = vadd.f32 0.0, %v1441
      %v1443 = vpop.f32.mrf.mxu0
      %v1444 = vadd.f32 0.0, %v1443
      %1445 = vmatmul.bf16.gmra.mxu0 %v1410
      %v1446 = vpop.f32.mrf.mxu0
      %v1447 = vadd.f32 0.0, %v1446
      %v1448 = vpop.f32.mrf.mxu0
      %v1449 = vadd.f32 0.0, %v1448
      %1450 = vmatmul.bf16.gmra.mxu0 %v1413
      %v1451 = vpop.f32.mrf.mxu0
      %v1452 = vadd.f32 0.0, %v1451
      %v1453 = vpop.f32.mrf.mxu0
      %v1454 = vadd.f32 0.0, %v1453
      %1455 = vmatmul.bf16.gmra.mxu0 %v1416
      %v1456 = vpop.f32.mrf.mxu0
      %v1457 = vadd.f32 0.0, %v1456
      %v1458 = vpop.f32.mrf.mxu0
      %v1459 = vadd.f32 0.0, %v1458
      %1460 = vmatmul.bf16.gmra.mxu0 %v1419
      %v1461 = vpop.f32.mrf.mxu0
      %v1462 = vadd.f32 0.0, %v1461
      %v1463 = vpop.f32.mrf.mxu0
      %v1464 = vadd.f32 0.0, %v1463
      %1465 = vmatmul.bf16.gmra.mxu0 %v1422
      %v1466 = vpop.f32.mrf.mxu0
      %v1467 = vadd.f32 0.0, %v1466
      %v1468 = vpop.f32.mrf.mxu0
      %v1469 = vadd.f32 0.0, %v1468
      %1470 = vmatmul.bf16.gmra.mxu0 %v1425
      %v1471 = vpop.f32.mrf.mxu0
      %v1472 = vadd.f32 0.0, %v1471
      %v1473 = vpop.f32.mrf.mxu0
      %v1474 = vadd.f32 0.0, %v1473
      %1475 = vdwg.mxu0
      %1476 = vmatpush.bf16.msra.mxu0 0
      %1477 = vmatpush.bf16.msra.mxu0 0
      %1478 = vmatpush.bf16.msra.mxu0 0
      %1479 = vmatpush.bf16.msra.mxu0 0
      %1480 = vmatpush.bf16.msra.mxu0 0
      %1481 = vmatpush.bf16.msra.mxu0 0
      %1482 = vmatpush.bf16.msra.mxu0 %v1380
      %1483 = vmatpush.bf16.msra.mxu0 %v1372
      %1484 = vmatmul.bf16.gmra.mxu0 %v1404
      %v1485 = vpop.f32.mrf.mxu0
      %v1486 = vadd.f32 0.0, %v1485
      %v1487 = vpop.f32.mrf.mxu0
      %v1488 = vadd.f32 0.0, %v1487
      %1489 = vmatmul.bf16.gmra.mxu0 %v1407
      %v1490 = vpop.f32.mrf.mxu0
      %v1491 = vadd.f32 0.0, %v1490
      %v1492 = vpop.f32.mrf.mxu0
      %v1493 = vadd.f32 0.0, %v1492
      %1494 = vmatmul.bf16.gmra.mxu0 %v1410
      %v1495 = vpop.f32.mrf.mxu0
      %v1496 = vadd.f32 0.0, %v1495
      %v1497 = vpop.f32.mrf.mxu0
      %v1498 = vadd.f32 0.0, %v1497
      %1499 = vmatmul.bf16.gmra.mxu0 %v1413
      %v1500 = vpop.f32.mrf.mxu0
      %v1501 = vadd.f32 0.0, %v1500
      %v1502 = vpop.f32.mrf.mxu0
      %v1503 = vadd.f32 0.0, %v1502
      %1504 = vmatmul.bf16.gmra.mxu0 %v1416
      %v1505 = vpop.f32.mrf.mxu0
      %v1506 = vadd.f32 0.0, %v1505
      %v1507 = vpop.f32.mrf.mxu0
      %v1508 = vadd.f32 0.0, %v1507
      %1509 = vmatmul.bf16.gmra.mxu0 %v1419
      %v1510 = vpop.f32.mrf.mxu0
      %v1511 = vadd.f32 0.0, %v1510
      %v1512 = vpop.f32.mrf.mxu0
      %v1513 = vadd.f32 0.0, %v1512
      %1514 = vmatmul.bf16.gmra.mxu0 %v1422
      %v1515 = vpop.f32.mrf.mxu0
      %v1516 = vadd.f32 0.0, %v1515
      %v1517 = vpop.f32.mrf.mxu0
      %v1518 = vadd.f32 0.0, %v1517
      %1519 = vmatmul.bf16.gmra.mxu0 %v1425
      %v1520 = vpop.f32.mrf.mxu0
      %v1521 = vadd.f32 0.0, %v1520
      %v1522 = vpop.f32.mrf.mxu0
      %v1523 = vadd.f32 0.0, %v1522
      %1524 = vdwg.mxu0
      %1525 = vmatpush.bf16.msra.mxu0 0
      %1526 = vmatpush.bf16.msra.mxu0 0
      %1527 = vmatpush.bf16.msra.mxu0 0
      %1528 = vmatpush.bf16.msra.mxu0 0
      %1529 = vmatpush.bf16.msra.mxu0 0
      %1530 = vmatpush.bf16.msra.mxu0 0
      %1531 = vmatpush.bf16.msra.mxu0 %v1381
      %1532 = vmatpush.bf16.msra.mxu0 %v1373
      %1533 = vmatmul.bf16.gmra.mxu0 %v1404
      %v1534 = vpop.f32.mrf.mxu0
      %v1535 = vadd.f32 0.0, %v1534
      %v1536 = vpop.f32.mrf.mxu0
      %v1537 = vadd.f32 0.0, %v1536
      %1538 = vmatmul.bf16.gmra.mxu0 %v1407
      %v1539 = vpop.f32.mrf.mxu0
      %v1540 = vadd.f32 0.0, %v1539
      %v1541 = vpop.f32.mrf.mxu0
      %v1542 = vadd.f32 0.0, %v1541
      %1543 = vmatmul.bf16.gmra.mxu0 %v1410
      %v1544 = vpop.f32.mrf.mxu0
      %v1545 = vadd.f32 0.0, %v1544
      %v1546 = vpop.f32.mrf.mxu0
      %v1547 = vadd.f32 0.0, %v1546
      %1548 = vmatmul.bf16.gmra.mxu0 %v1413
      %v1549 = vpop.f32.mrf.mxu0
      %v1550 = vadd.f32 0.0, %v1549
      %v1551 = vpop.f32.mrf.mxu0
      %v1552 = vadd.f32 0.0, %v1551
      %1553 = vmatmul.bf16.gmra.mxu0 %v1416
      %v1554 = vpop.f32.mrf.mxu0
      %v1555 = vadd.f32 0.0, %v1554
      %v1556 = vpop.f32.mrf.mxu0
      %v1557 = vadd.f32 0.0, %v1556
      %1558 = vmatmul.bf16.gmra.mxu0 %v1419
      %v1559 = vpop.f32.mrf.mxu0
      %v1560 = vadd.f32 0.0, %v1559
      %v1561 = vpop.f32.mrf.mxu0
      %v1562 = vadd.f32 0.0, %v1561
      %1563 = vmatmul.bf16.gmra.mxu0 %v1422
      %v1564 = vpop.f32.mrf.mxu0
      %v1565 = vadd.f32 0.0, %v1564
      %v1566 = vpop.f32.mrf.mxu0
      %v1567 = vadd.f32 0.0, %v1566
      %1568 = vmatmul.bf16.gmra.mxu0 %v1425
      %v1569 = vpop.f32.mrf.mxu0
      %v1570 = vadd.f32 0.0, %v1569
      %v1571 = vpop.f32.mrf.mxu0
      %v1572 = vadd.f32 0.0, %v1571
      %1573 = vdwg.mxu0
      %1574 = vmatpush.bf16.msra.mxu0 0
      %1575 = vmatpush.bf16.msra.mxu0 0
      %1576 = vmatpush.bf16.msra.mxu0 0
      %1577 = vmatpush.bf16.msra.mxu0 0
      %1578 = vmatpush.bf16.msra.mxu0 0
      %1579 = vmatpush.bf16.msra.mxu0 0
      %1580 = vmatpush.bf16.msra.mxu0 %v1382
      %1581 = vmatpush.bf16.msra.mxu0 %v1374
      %1582 = vmatmul.bf16.gmra.mxu0 %v1404
      %v1583 = vpop.f32.mrf.mxu0
      %v1584 = vadd.f32 0.0, %v1583
      %v1585 = vpop.f32.mrf.mxu0
      %v1586 = vadd.f32 0.0, %v1585
      %1587 = vmatmul.bf16.gmra.mxu0 %v1407
      %v1588 = vpop.f32.mrf.mxu0
      %v1589 = vadd.f32 0.0, %v1588
      %v1590 = vpop.f32.mrf.mxu0
      %v1591 = vadd.f32 0.0, %v1590
      %1592 = vmatmul.bf16.gmra.mxu0 %v1410
      %v1593 = vpop.f32.mrf.mxu0
      %v1594 = vadd.f32 0.0, %v1593
      %v1595 = vpop.f32.mrf.mxu0
      %v1596 = vadd.f32 0.0, %v1595
      %1597 = vmatmul.bf16.gmra.mxu0 %v1413
      %v1598 = vpop.f32.mrf.mxu0
      %v1599 = vadd.f32 0.0, %v1598
      %v1600 = vpop.f32.mrf.mxu0
      %v1601 = vadd.f32 0.0, %v1600
      %1602 = vmatmul.bf16.gmra.mxu0 %v1416
      %v1603 = vpop.f32.mrf.mxu0
      %v1604 = vadd.f32 0.0, %v1603
      %v1605 = vpop.f32.mrf.mxu0
      %v1606 = vadd.f32 0.0, %v1605
      %1607 = vmatmul.bf16.gmra.mxu0 %v1419
      %v1608 = vpop.f32.mrf.mxu0
      %v1609 = vadd.f32 0.0, %v1608
      %v1610 = vpop.f32.mrf.mxu0
      %v1611 = vadd.f32 0.0, %v1610
      %1612 = vmatmul.bf16.gmra.mxu0 %v1422
      %v1613 = vpop.f32.mrf.mxu0
      %v1614 = vadd.f32 0.0, %v1613
      %v1615 = vpop.f32.mrf.mxu0
      %v1616 = vadd.f32 0.0, %v1615
      %1617 = vmatmul.bf16.gmra.mxu0 %v1425
      %v1618 = vpop.f32.mrf.mxu0
      %v1619 = vadd.f32 0.0, %v1618
      %v1620 = vpop.f32.mrf.mxu0
      %v1621 = vadd.f32 0.0, %v1620
      %1622 = vdwg.mxu0
      %1623 = vmatpush.bf16.msra.mxu0 0
      %1624 = vmatpush.bf16.msra.mxu0 0
      %1625 = vmatpush.bf16.msra.mxu0 0
      %1626 = vmatpush.bf16.msra.mxu0 0
      %1627 = vmatpush.bf16.msra.mxu0 0
      %1628 = vmatpush.bf16.msra.mxu0 0
      %1629 = vmatpush.bf16.msra.mxu0 %v1383
      %1630 = vmatpush.bf16.msra.mxu0 %v1375
      %1631 = vmatmul.bf16.gmra.mxu0 %v1404
      %v1632 = vpop.f32.mrf.mxu0
      %v1633 = vadd.f32 0.0, %v1632
      %v1634 = vpop.f32.mrf.mxu0
      %v1635 = vadd.f32 0.0, %v1634
      %1636 = vmatmul.bf16.gmra.mxu0 %v1407
      %v1637 = vpop.f32.mrf.mxu0
      %v1638 = vadd.f32 0.0, %v1637
      %v1639 = vpop.f32.mrf.mxu0
      %v1640 = vadd.f32 0.0, %v1639
      %1641 = vmatmul.bf16.gmra.mxu0 %v1410
      %v1642 = vpop.f32.mrf.mxu0
      %v1643 = vadd.f32 0.0, %v1642
      %v1644 = vpop.f32.mrf.mxu0
      %v1645 = vadd.f32 0.0, %v1644
      %1646 = vmatmul.bf16.gmra.mxu0 %v1413
      %v1647 = vpop.f32.mrf.mxu0
      %v1648 = vadd.f32 0.0, %v1647
      %v1649 = vpop.f32.mrf.mxu0
      %v1650 = vadd.f32 0.0, %v1649
      %1651 = vmatmul.bf16.gmra.mxu0 %v1416
      %v1652 = vpop.f32.mrf.mxu0
      %v1653 = vadd.f32 0.0, %v1652
      %v1654 = vpop.f32.mrf.mxu0
      %v1655 = vadd.f32 0.0, %v1654
      %1656 = vmatmul.bf16.gmra.mxu0 %v1419
      %v1657 = vpop.f32.mrf.mxu0
      %v1658 = vadd.f32 0.0, %v1657
      %v1659 = vpop.f32.mrf.mxu0
      %v1660 = vadd.f32 0.0, %v1659
      %1661 = vmatmul.bf16.gmra.mxu0 %v1422
      %v1662 = vpop.f32.mrf.mxu0
      %v1663 = vadd.f32 0.0, %v1662
      %v1664 = vpop.f32.mrf.mxu0
      %v1665 = vadd.f32 0.0, %v1664
      %1666 = vmatmul.bf16.gmra.mxu0 %v1425
      %v1667 = vpop.f32.mrf.mxu0
      %v1668 = vadd.f32 0.0, %v1667
      %v1669 = vpop.f32.mrf.mxu0
      %v1670 = vadd.f32 0.0, %v1669
      %1671 = vdwg.mxu0
      %1672 = vmatpush.bf16.msra.mxu0 0
      %1673 = vmatpush.bf16.msra.mxu0 0
      %1674 = vmatpush.bf16.msra.mxu0 0
      %1675 = vmatpush.bf16.msra.mxu0 0
      %1676 = vmatpush.bf16.msra.mxu0 0
      %1677 = vmatpush.bf16.msra.mxu0 0
      %1678 = vmatpush.bf16.msra.mxu0 %v1384
      %1679 = vmatpush.bf16.msra.mxu0 %v1376
      %1680 = vmatmul.bf16.gmra.mxu0 %v1404
      %v1681 = vpop.f32.mrf.mxu0
      %v1682 = vadd.f32 0.0, %v1681
      %v1683 = vpop.f32.mrf.mxu0
      %v1684 = vadd.f32 0.0, %v1683
      %1685 = vmatmul.bf16.gmra.mxu0 %v1407
      %v1686 = vpop.f32.mrf.mxu0
      %v1687 = vadd.f32 0.0, %v1686
      %v1688 = vpop.f32.mrf.mxu0
      %v1689 = vadd.f32 0.0, %v1688
      %1690 = vmatmul.bf16.gmra.mxu0 %v1410
      %v1691 = vpop.f32.mrf.mxu0
      %v1692 = vadd.f32 0.0, %v1691
      %v1693 = vpop.f32.mrf.mxu0
      %v1694 = vadd.f32 0.0, %v1693
      %1695 = vmatmul.bf16.gmra.mxu0 %v1413
      %v1696 = vpop.f32.mrf.mxu0
      %v1697 = vadd.f32 0.0, %v1696
      %v1698 = vpop.f32.mrf.mxu0
      %v1699 = vadd.f32 0.0, %v1698
      %1700 = vmatmul.bf16.gmra.mxu0 %v1416
      %v1701 = vpop.f32.mrf.mxu0
      %v1702 = vadd.f32 0.0, %v1701
      %v1703 = vpop.f32.mrf.mxu0
      %v1704 = vadd.f32 0.0, %v1703
      %1705 = vmatmul.bf16.gmra.mxu0 %v1419
      %v1706 = vpop.f32.mrf.mxu0
      %v1707 = vadd.f32 0.0, %v1706
      %v1708 = vpop.f32.mrf.mxu0
      %v1709 = vadd.f32 0.0, %v1708
      %1710 = vmatmul.bf16.gmra.mxu0 %v1422
      %v1711 = vpop.f32.mrf.mxu0
      %v1712 = vadd.f32 0.0, %v1711
      %v1713 = vpop.f32.mrf.mxu0
      %v1714 = vadd.f32 0.0, %v1713
      %1715 = vmatmul.bf16.gmra.mxu0 %v1425
      %v1716 = vpop.f32.mrf.mxu0
      %v1717 = vadd.f32 0.0, %v1716
      %v1718 = vpop.f32.mrf.mxu0
      %v1719 = vadd.f32 0.0, %v1718
      %1720 = vdwg.mxu0
      %1721 = vmatpush.bf16.msra.mxu0 0
      %1722 = vmatpush.bf16.msra.mxu0 0
      %1723 = vmatpush.bf16.msra.mxu0 0
      %1724 = vmatpush.bf16.msra.mxu0 0
      %1725 = vmatpush.bf16.msra.mxu0 0
      %1726 = vmatpush.bf16.msra.mxu0 0
      %1727 = vmatpush.bf16.msra.mxu0 %v1385
      %1728 = vmatpush.bf16.msra.mxu0 %v1377
      %1729 = vmatmul.bf16.gmra.mxu0 %v1404
      %v1730 = vpop.f32.mrf.mxu0
      %v1731 = vadd.f32 0.0, %v1730
      %v1732 = vpop.f32.mrf.mxu0
      %v1733 = vadd.f32 0.0, %v1732
      %1734 = vmatmul.bf16.gmra.mxu0 %v1407
      %v1735 = vpop.f32.mrf.mxu0
      %v1736 = vadd.f32 0.0, %v1735
      %v1737 = vpop.f32.mrf.mxu0
      %v1738 = vadd.f32 0.0, %v1737
      %1739 = vmatmul.bf16.gmra.mxu0 %v1410
      %v1740 = vpop.f32.mrf.mxu0
      %v1741 = vadd.f32 0.0, %v1740
      %v1742 = vpop.f32.mrf.mxu0
      %v1743 = vadd.f32 0.0, %v1742
      %1744 = vmatmul.bf16.gmra.mxu0 %v1413
      %v1745 = vpop.f32.mrf.mxu0
      %v1746 = vadd.f32 0.0, %v1745
      %v1747 = vpop.f32.mrf.mxu0
      %v1748 = vadd.f32 0.0, %v1747
      %1749 = vmatmul.bf16.gmra.mxu0 %v1416
      %v1750 = vpop.f32.mrf.mxu0
      %v1751 = vadd.f32 0.0, %v1750
      %v1752 = vpop.f32.mrf.mxu0
      %v1753 = vadd.f32 0.0, %v1752
      %1754 = vmatmul.bf16.gmra.mxu0 %v1419
      %v1755 = vpop.f32.mrf.mxu0
      %v1756 = vadd.f32 0.0, %v1755
      %v1757 = vpop.f32.mrf.mxu0
      %v1758 = vadd.f32 0.0, %v1757
      %1759 = vmatmul.bf16.gmra.mxu0 %v1422
      %v1760 = vpop.f32.mrf.mxu0
      %v1761 = vadd.f32 0.0, %v1760
      %v1762 = vpop.f32.mrf.mxu0
      %v1763 = vadd.f32 0.0, %v1762
      %1764 = vmatmul.bf16.gmra.mxu0 %v1425
      %v1765 = vpop.f32.mrf.mxu0
      %v1766 = vadd.f32 0.0, %v1765
      %v1767 = vpop.f32.mrf.mxu0
      %v1768 = vadd.f32 0.0, %v1767
      %1769 = vdwg.mxu0
      %1770 = vmatpush.bf16.msra.mxu0 0
      %1771 = vmatpush.bf16.msra.mxu0 0
      %1772 = vmatpush.bf16.msra.mxu0 0
      %1773 = vmatpush.bf16.msra.mxu0 0
      %1774 = vmatpush.bf16.msra.mxu0 0
      %1775 = vmatpush.bf16.msra.mxu0 0
      %1776 = vmatpush.bf16.msra.mxu0 %v1386
      %1777 = vmatpush.bf16.msra.mxu0 %v1378
      %1778 = vmatmul.bf16.gmra.mxu0 %v1404
      %v1779 = vpop.f32.mrf.mxu0
      %v1780 = vadd.f32 0.0, %v1779
      %v1781 = vpop.f32.mrf.mxu0
      %v1782 = vadd.f32 0.0, %v1781
      %1783 = vmatmul.bf16.gmra.mxu0 %v1407
      %v1784 = vpop.f32.mrf.mxu0
      %v1785 = vadd.f32 0.0, %v1784
      %v1786 = vpop.f32.mrf.mxu0
      %v1787 = vadd.f32 0.0, %v1786
      %1788 = vmatmul.bf16.gmra.mxu0 %v1410
      %v1789 = vpop.f32.mrf.mxu0
      %v1790 = vadd.f32 0.0, %v1789
      %v1791 = vpop.f32.mrf.mxu0
      %v1792 = vadd.f32 0.0, %v1791
      %1793 = vmatmul.bf16.gmra.mxu0 %v1413
      %v1794 = vpop.f32.mrf.mxu0
      %v1795 = vadd.f32 0.0, %v1794
      %v1796 = vpop.f32.mrf.mxu0
      %v1797 = vadd.f32 0.0, %v1796
      %1798 = vmatmul.bf16.gmra.mxu0 %v1416
      %v1799 = vpop.f32.mrf.mxu0
      %v1800 = vadd.f32 0.0, %v1799
      %v1801 = vpop.f32.mrf.mxu0
      %v1802 = vadd.f32 0.0, %v1801
      %1803 = vmatmul.bf16.gmra.mxu0 %v1419
      %v1804 = vpop.f32.mrf.mxu0
      %v1805 = vadd.f32 0.0, %v1804
      %v1806 = vpop.f32.mrf.mxu0
      %v1807 = vadd.f32 0.0, %v1806
      %1808 = vmatmul.bf16.gmra.mxu0 %v1422
      %v1809 = vpop.f32.mrf.mxu0
      %v1810 = vadd.f32 0.0, %v1809
      %v1811 = vpop.f32.mrf.mxu0
      %v1812 = vadd.f32 0.0, %v1811
      %1813 = vmatmul.bf16.gmra.mxu0 %v1425
      %v1814 = vpop.f32.mrf.mxu0
      %v1815 = vadd.f32 0.0, %v1814
      %v1816 = vpop.f32.mrf.mxu0
      %v1817 = vadd.f32 0.0, %v1816
      %1818 = vdwg.mxu0
      %v1819 = vmul.f32 %v689, %v1437
      %v1820 = vmul.f32 %v738, %v1486
      %v1821 = vmul.f32 %v787, %v1535
      %v1822 = vmul.f32 %v836, %v1584
      %v1823 = vmul.f32 %v885, %v1633
      %v1824 = vmul.f32 %v934, %v1682
      %v1825 = vmul.f32 %v983, %v1731
      %v1826 = vmul.f32 %v1032, %v1780
      %v1827 = vmul.f32 %v691, %v1439
      %v1828 = vmul.f32 %v740, %v1488
      %v1829 = vmul.f32 %v789, %v1537
      %v1830 = vmul.f32 %v838, %v1586
      %v1831 = vmul.f32 %v887, %v1635
      %v1832 = vmul.f32 %v936, %v1684
      %v1833 = vmul.f32 %v985, %v1733
      %v1834 = vmul.f32 %v1034, %v1782
      %v1835 = vmul.f32 %v694, %v1442
      %v1836 = vmul.f32 %v743, %v1491
      %v1837 = vmul.f32 %v792, %v1540
      %v1838 = vmul.f32 %v841, %v1589
      %v1839 = vmul.f32 %v890, %v1638
      %v1840 = vmul.f32 %v939, %v1687
      %v1841 = vmul.f32 %v988, %v1736
      %v1842 = vmul.f32 %v1037, %v1785
      %v1843 = vmul.f32 %v696, %v1444
      %v1844 = vmul.f32 %v745, %v1493
      %v1845 = vmul.f32 %v794, %v1542
      %v1846 = vmul.f32 %v843, %v1591
      %v1847 = vmul.f32 %v892, %v1640
      %v1848 = vmul.f32 %v941, %v1689
      %v1849 = vmul.f32 %v990, %v1738
      %v1850 = vmul.f32 %v1039, %v1787
      %v1851 = vmul.f32 %v699, %v1447
      %v1852 = vmul.f32 %v748, %v1496
      %v1853 = vmul.f32 %v797, %v1545
      %v1854 = vmul.f32 %v846, %v1594
      %v1855 = vmul.f32 %v895, %v1643
      %v1856 = vmul.f32 %v944, %v1692
      %v1857 = vmul.f32 %v993, %v1741
      %v1858 = vmul.f32 %v1042, %v1790
      %v1859 = vmul.f32 %v701, %v1449
      %v1860 = vmul.f32 %v750, %v1498
      %v1861 = vmul.f32 %v799, %v1547
      %v1862 = vmul.f32 %v848, %v1596
      %v1863 = vmul.f32 %v897, %v1645
      %v1864 = vmul.f32 %v946, %v1694
      %v1865 = vmul.f32 %v995, %v1743
      %v1866 = vmul.f32 %v1044, %v1792
      %v1867 = vmul.f32 %v704, %v1452
      %v1868 = vmul.f32 %v753, %v1501
      %v1869 = vmul.f32 %v802, %v1550
      %v1870 = vmul.f32 %v851, %v1599
      %v1871 = vmul.f32 %v900, %v1648
      %v1872 = vmul.f32 %v949, %v1697
      %v1873 = vmul.f32 %v998, %v1746
      %v1874 = vmul.f32 %v1047, %v1795
      %v1875 = vmul.f32 %v706, %v1454
      %v1876 = vmul.f32 %v755, %v1503
      %v1877 = vmul.f32 %v804, %v1552
      %v1878 = vmul.f32 %v853, %v1601
      %v1879 = vmul.f32 %v902, %v1650
      %v1880 = vmul.f32 %v951, %v1699
      %v1881 = vmul.f32 %v1000, %v1748
      %v1882 = vmul.f32 %v1049, %v1797
      %v1883 = vmul.f32 %v709, %v1457
      %v1884 = vmul.f32 %v758, %v1506
      %v1885 = vmul.f32 %v807, %v1555
      %v1886 = vmul.f32 %v856, %v1604
      %v1887 = vmul.f32 %v905, %v1653
      %v1888 = vmul.f32 %v954, %v1702
      %v1889 = vmul.f32 %v1003, %v1751
      %v1890 = vmul.f32 %v1052, %v1800
      %v1891 = vmul.f32 %v711, %v1459
      %v1892 = vmul.f32 %v760, %v1508
      %v1893 = vmul.f32 %v809, %v1557
      %v1894 = vmul.f32 %v858, %v1606
      %v1895 = vmul.f32 %v907, %v1655
      %v1896 = vmul.f32 %v956, %v1704
      %v1897 = vmul.f32 %v1005, %v1753
      %v1898 = vmul.f32 %v1054, %v1802
      %v1899 = vmul.f32 %v714, %v1462
      %v1900 = vmul.f32 %v763, %v1511
      %v1901 = vmul.f32 %v812, %v1560
      %v1902 = vmul.f32 %v861, %v1609
      %v1903 = vmul.f32 %v910, %v1658
      %v1904 = vmul.f32 %v959, %v1707
      %v1905 = vmul.f32 %v1008, %v1756
      %v1906 = vmul.f32 %v1057, %v1805
      %v1907 = vmul.f32 %v716, %v1464
      %v1908 = vmul.f32 %v765, %v1513
      %v1909 = vmul.f32 %v814, %v1562
      %v1910 = vmul.f32 %v863, %v1611
      %v1911 = vmul.f32 %v912, %v1660
      %v1912 = vmul.f32 %v961, %v1709
      %v1913 = vmul.f32 %v1010, %v1758
      %v1914 = vmul.f32 %v1059, %v1807
      %v1915 = vmul.f32 %v719, %v1467
      %v1916 = vmul.f32 %v768, %v1516
      %v1917 = vmul.f32 %v817, %v1565
      %v1918 = vmul.f32 %v866, %v1614
      %v1919 = vmul.f32 %v915, %v1663
      %v1920 = vmul.f32 %v964, %v1712
      %v1921 = vmul.f32 %v1013, %v1761
      %v1922 = vmul.f32 %v1062, %v1810
      %v1923 = vmul.f32 %v721, %v1469
      %v1924 = vmul.f32 %v770, %v1518
      %v1925 = vmul.f32 %v819, %v1567
      %v1926 = vmul.f32 %v868, %v1616
      %v1927 = vmul.f32 %v917, %v1665
      %v1928 = vmul.f32 %v966, %v1714
      %v1929 = vmul.f32 %v1015, %v1763
      %v1930 = vmul.f32 %v1064, %v1812
      %v1931 = vmul.f32 %v724, %v1472
      %v1932 = vmul.f32 %v773, %v1521
      %v1933 = vmul.f32 %v822, %v1570
      %v1934 = vmul.f32 %v871, %v1619
      %v1935 = vmul.f32 %v920, %v1668
      %v1936 = vmul.f32 %v969, %v1717
      %v1937 = vmul.f32 %v1018, %v1766
      %v1938 = vmul.f32 %v1067, %v1815
      %v1939 = vmul.f32 %v726, %v1474
      %v1940 = vmul.f32 %v775, %v1523
      %v1941 = vmul.f32 %v824, %v1572
      %v1942 = vmul.f32 %v873, %v1621
      %v1943 = vmul.f32 %v922, %v1670
      %v1944 = vmul.f32 %v971, %v1719
      %v1945 = vmul.f32 %v1020, %v1768
      %v1946 = vmul.f32 %v1069, %v1817
      %v1947 = vpack.c.bf16 %v1827, %v1819
      %v1948 = vpack.c.bf16 %v1828, %v1820
      %v1949 = vpack.c.bf16 %v1829, %v1821
      %v1950 = vpack.c.bf16 %v1830, %v1822
      %v1951 = vpack.c.bf16 %v1831, %v1823
      %v1952 = vpack.c.bf16 %v1832, %v1824
      %v1953 = vpack.c.bf16 %v1833, %v1825
      %v1954 = vpack.c.bf16 %v1834, %v1826
      %v1955 = vpack.c.bf16 %v1843, %v1835
      %v1956 = vpack.c.bf16 %v1844, %v1836
      %v1957 = vpack.c.bf16 %v1845, %v1837
      %v1958 = vpack.c.bf16 %v1846, %v1838
      %v1959 = vpack.c.bf16 %v1847, %v1839
      %v1960 = vpack.c.bf16 %v1848, %v1840
      %v1961 = vpack.c.bf16 %v1849, %v1841
      %v1962 = vpack.c.bf16 %v1850, %v1842
      %v1963 = vpack.c.bf16 %v1859, %v1851
      %v1964 = vpack.c.bf16 %v1860, %v1852
      %v1965 = vpack.c.bf16 %v1861, %v1853
      %v1966 = vpack.c.bf16 %v1862, %v1854
      %v1967 = vpack.c.bf16 %v1863, %v1855
      %v1968 = vpack.c.bf16 %v1864, %v1856
      %v1969 = vpack.c.bf16 %v1865, %v1857
      %v1970 = vpack.c.bf16 %v1866, %v1858
      %v1971 = vpack.c.bf16 %v1875, %v1867
      %v1972 = vpack.c.bf16 %v1876, %v1868
      %v1973 = vpack.c.bf16 %v1877, %v1869
      %v1974 = vpack.c.bf16 %v1878, %v1870
      %v1975 = vpack.c.bf16 %v1879, %v1871
      %v1976 = vpack.c.bf16 %v1880, %v1872
      %v1977 = vpack.c.bf16 %v1881, %v1873
      %v1978 = vpack.c.bf16 %v1882, %v1874
      %v1979 = vpack.c.bf16 %v1891, %v1883
      %v1980 = vpack.c.bf16 %v1892, %v1884
      %v1981 = vpack.c.bf16 %v1893, %v1885
      %v1982 = vpack.c.bf16 %v1894, %v1886
      %v1983 = vpack.c.bf16 %v1895, %v1887
      %v1984 = vpack.c.bf16 %v1896, %v1888
      %v1985 = vpack.c.bf16 %v1897, %v1889
      %v1986 = vpack.c.bf16 %v1898, %v1890
      %v1987 = vpack.c.bf16 %v1907, %v1899
      %v1988 = vpack.c.bf16 %v1908, %v1900
      %v1989 = vpack.c.bf16 %v1909, %v1901
      %v1990 = vpack.c.bf16 %v1910, %v1902
      %v1991 = vpack.c.bf16 %v1911, %v1903
      %v1992 = vpack.c.bf16 %v1912, %v1904
      %v1993 = vpack.c.bf16 %v1913, %v1905
      %v1994 = vpack.c.bf16 %v1914, %v1906
      %v1995 = vpack.c.bf16 %v1923, %v1915
      %v1996 = vpack.c.bf16 %v1924, %v1916
      %v1997 = vpack.c.bf16 %v1925, %v1917
      %v1998 = vpack.c.bf16 %v1926, %v1918
      %v1999 = vpack.c.bf16 %v1927, %v1919
      %v2000 = vpack.c.bf16 %v1928, %v1920
      %v2001 = vpack.c.bf16 %v1929, %v1921
      %v2002 = vpack.c.bf16 %v1930, %v1922
      %v2003 = vpack.c.bf16 %v1939, %v1931
      %v2004 = vpack.c.bf16 %v1940, %v1932
      %v2005 = vpack.c.bf16 %v1941, %v1933
      %v2006 = vpack.c.bf16 %v1942, %v1934
      %v2007 = vpack.c.bf16 %v1943, %v1935
      %v2008 = vpack.c.bf16 %v1944, %v1936
      %v2009 = vpack.c.bf16 %v1945, %v1937
      %v2010 = vpack.c.bf16 %v1946, %v1938
      %v2011 = vld [vmem:[%s8] sm:$0xf]
      %v2012 = vld [vmem:[%s8 + $0x4] sm:$0xf]
      %v2013 = vld [vmem:[%s8 + $0x8] sm:$0xf]
      %v2014 = vld [vmem:[%s8 + $0xc] sm:$0xf]
      %v2015 = vld [vmem:[%s8 + $0x10] sm:$0xf]
      %v2016 = vld [vmem:[%s8 + $0x14] sm:$0xf]
      %v2017 = vld [vmem:[%s8 + $0x18] sm:$0xf]
      %v2018 = vld [vmem:[%s8 + $0x1c] sm:$0xf]
      %v2019 = vld [vmem:[%s8 + $0x20] sm:$0xf]
      %v2020 = vld [vmem:[%s8 + $0x24] sm:$0xf]
      %v2021 = vld [vmem:[%s8 + $0x28] sm:$0xf]
      %v2022 = vld [vmem:[%s8 + $0x2c] sm:$0xf]
      %v2023 = vld [vmem:[%s8 + $0x30] sm:$0xf]
      %v2024 = vld [vmem:[%s8 + $0x34] sm:$0xf]
      %v2025 = vld [vmem:[%s8 + $0x38] sm:$0xf]
      %v2026 = vld [vmem:[%s8 + $0x3c] sm:$0xf]
      %v2027 = vld [vmem:[%s8 + $0x40] sm:$0xf]
      %v2028 = vld [vmem:[%s8 + $0x44] sm:$0xf]
      %v2029 = vld [vmem:[%s8 + $0x48] sm:$0xf]
      %v2030 = vld [vmem:[%s8 + $0x4c] sm:$0xf]
      %v2031 = vld [vmem:[%s8 + $0x50] sm:$0xf]
      %v2032 = vld [vmem:[%s8 + $0x54] sm:$0xf]
      %v2033 = vld [vmem:[%s8 + $0x58] sm:$0xf]
      %v2034 = vld [vmem:[%s8 + $0x5c] sm:$0xf]
      %v2035 = vld [vmem:[%s8 + $0x60] sm:$0xf]
      %v2036 = vld [vmem:[%s8 + $0x64] sm:$0xf]
      %v2037 = vld [vmem:[%s8 + $0x68] sm:$0xf]
      %v2038 = vld [vmem:[%s8 + $0x6c] sm:$0xf]
      %v2039 = vld [vmem:[%s8 + $0x70] sm:$0xf]
      %v2040 = vld [vmem:[%s8 + $0x74] sm:$0xf]
      %v2041 = vld [vmem:[%s8 + $0x78] sm:$0xf]
      %v2042 = vld [vmem:[%s8 + $0x7c] sm:$0xf]
      %v2043 = vld [vmem:[%s8 + $0x80] sm:$0xf]
      %v2044 = vld [vmem:[%s8 + $0x84] sm:$0xf]
      %v2045 = vld [vmem:[%s8 + $0x88] sm:$0xf]
      %v2046 = vld [vmem:[%s8 + $0x8c] sm:$0xf]
      %v2047 = vld [vmem:[%s8 + $0x90] sm:$0xf]
      %v2048 = vld [vmem:[%s8 + $0x94] sm:$0xf]
      %v2049 = vld [vmem:[%s8 + $0x98] sm:$0xf]
      %v2050 = vld [vmem:[%s8 + $0x9c] sm:$0xf]
      %v2051 = vld [vmem:[%s8 + $0xa0] sm:$0xf]
      %v2052 = vld [vmem:[%s8 + $0xa4] sm:$0xf]
      %v2053 = vld [vmem:[%s8 + $0xa8] sm:$0xf]
      %v2054 = vld [vmem:[%s8 + $0xac] sm:$0xf]
      %v2055 = vld [vmem:[%s8 + $0xb0] sm:$0xf]
      %v2056 = vld [vmem:[%s8 + $0xb4] sm:$0xf]
      %v2057 = vld [vmem:[%s8 + $0xb8] sm:$0xf]
      %v2058 = vld [vmem:[%s8 + $0xbc] sm:$0xf]
      %v2059 = vld [vmem:[%s8 + $0xc0] sm:$0xf]
      %v2060 = vld [vmem:[%s8 + $0xc4] sm:$0xf]
      %v2061 = vld [vmem:[%s8 + $0xc8] sm:$0xf]
      %v2062 = vld [vmem:[%s8 + $0xcc] sm:$0xf]
      %v2063 = vld [vmem:[%s8 + $0xd0] sm:$0xf]
      %v2064 = vld [vmem:[%s8 + $0xd4] sm:$0xf]
      %v2065 = vld [vmem:[%s8 + $0xd8] sm:$0xf]
      %v2066 = vld [vmem:[%s8 + $0xdc] sm:$0xf]
      %v2067 = vld [vmem:[%s8 + $0xe0] sm:$0xf]
      %v2068 = vld [vmem:[%s8 + $0xe4] sm:$0xf]
      %v2069 = vld [vmem:[%s8 + $0xe8] sm:$0xf]
      %v2070 = vld [vmem:[%s8 + $0xec] sm:$0xf]
      %v2071 = vld [vmem:[%s8 + $0xf0] sm:$0xf]
      %v2072 = vld [vmem:[%s8 + $0xf4] sm:$0xf]
      %v2073 = vld [vmem:[%s8 + $0xf8] sm:$0xf]
      %v2074 = vld [vmem:[%s8 + $0xfc] sm:$0xf]
      %v2075 = vld [vmem:[%s8 + $0x100] sm:$0xf]
      %v2076 = vld [vmem:[%s8 + $0x104] sm:$0xf]
      %v2077 = vld [vmem:[%s8 + $0x108] sm:$0xf]
      %v2078 = vld [vmem:[%s8 + $0x10c] sm:$0xf]
      %v2079 = vld [vmem:[%s8 + $0x110] sm:$0xf]
      %v2080 = vld [vmem:[%s8 + $0x114] sm:$0xf]
      %v2081 = vld [vmem:[%s8 + $0x118] sm:$0xf]
      %v2082 = vld [vmem:[%s8 + $0x11c] sm:$0xf]
      %v2083 = vld [vmem:[%s8 + $0x120] sm:$0xf]
      %v2084 = vld [vmem:[%s8 + $0x124] sm:$0xf]
      %v2085 = vld [vmem:[%s8 + $0x128] sm:$0xf]
      %v2086 = vld [vmem:[%s8 + $0x12c] sm:$0xf]
      %v2087 = vld [vmem:[%s8 + $0x130] sm:$0xf]
      %v2088 = vld [vmem:[%s8 + $0x134] sm:$0xf]
      %v2089 = vld [vmem:[%s8 + $0x138] sm:$0xf]
      %v2090 = vld [vmem:[%s8 + $0x13c] sm:$0xf]
      %v2091 = vld [vmem:[%s8 + $0x140] sm:$0xf]
      %v2092 = vld [vmem:[%s8 + $0x144] sm:$0xf]
      %v2093 = vld [vmem:[%s8 + $0x148] sm:$0xf]
      %v2094 = vld [vmem:[%s8 + $0x14c] sm:$0xf]
      %v2095 = vld [vmem:[%s8 + $0x150] sm:$0xf]
      %v2096 = vld [vmem:[%s8 + $0x154] sm:$0xf]
      %v2097 = vld [vmem:[%s8 + $0x158] sm:$0xf]
      %v2098 = vld [vmem:[%s8 + $0x15c] sm:$0xf]
      %v2099 = vld [vmem:[%s8 + $0x160] sm:$0xf]
      %v2100 = vld [vmem:[%s8 + $0x164] sm:$0xf]
      %v2101 = vld [vmem:[%s8 + $0x168] sm:$0xf]
      %v2102 = vld [vmem:[%s8 + $0x16c] sm:$0xf]
      %v2103 = vld [vmem:[%s8 + $0x170] sm:$0xf]
      %v2104 = vld [vmem:[%s8 + $0x174] sm:$0xf]
      %v2105 = vld [vmem:[%s8 + $0x178] sm:$0xf]
      %v2106 = vld [vmem:[%s8 + $0x17c] sm:$0xf]
      %v2107 = vld [vmem:[%s8 + $0x180] sm:$0xf]
      %v2108 = vld [vmem:[%s8 + $0x184] sm:$0xf]
      %v2109 = vld [vmem:[%s8 + $0x188] sm:$0xf]
      %v2110 = vld [vmem:[%s8 + $0x18c] sm:$0xf]
      %v2111 = vld [vmem:[%s8 + $0x190] sm:$0xf]
      %v2112 = vld [vmem:[%s8 + $0x194] sm:$0xf]
      %v2113 = vld [vmem:[%s8 + $0x198] sm:$0xf]
      %v2114 = vld [vmem:[%s8 + $0x19c] sm:$0xf]
      %v2115 = vld [vmem:[%s8 + $0x1a0] sm:$0xf]
      %v2116 = vld [vmem:[%s8 + $0x1a4] sm:$0xf]
      %v2117 = vld [vmem:[%s8 + $0x1a8] sm:$0xf]
      %v2118 = vld [vmem:[%s8 + $0x1ac] sm:$0xf]
      %v2119 = vld [vmem:[%s8 + $0x1b0] sm:$0xf]
      %v2120 = vld [vmem:[%s8 + $0x1b4] sm:$0xf]
      %v2121 = vld [vmem:[%s8 + $0x1b8] sm:$0xf]
      %v2122 = vld [vmem:[%s8 + $0x1bc] sm:$0xf]
      %v2123 = vld [vmem:[%s8 + $0x1c0] sm:$0xf]
      %v2124 = vld [vmem:[%s8 + $0x1c4] sm:$0xf]
      %v2125 = vld [vmem:[%s8 + $0x1c8] sm:$0xf]
      %v2126 = vld [vmem:[%s8 + $0x1cc] sm:$0xf]
      %v2127 = vld [vmem:[%s8 + $0x1d0] sm:$0xf]
      %v2128 = vld [vmem:[%s8 + $0x1d4] sm:$0xf]
      %v2129 = vld [vmem:[%s8 + $0x1d8] sm:$0xf]
      %v2130 = vld [vmem:[%s8 + $0x1dc] sm:$0xf]
      %v2131 = vld [vmem:[%s8 + $0x1e0] sm:$0xf]
      %v2132 = vld [vmem:[%s8 + $0x1e4] sm:$0xf]
      %v2133 = vld [vmem:[%s8 + $0x1e8] sm:$0xf]
      %v2134 = vld [vmem:[%s8 + $0x1ec] sm:$0xf]
      %v2135 = vld [vmem:[%s8 + $0x1f0] sm:$0xf]
      %v2136 = vld [vmem:[%s8 + $0x1f4] sm:$0xf]
      %v2137 = vld [vmem:[%s8 + $0x1f8] sm:$0xf]
      %v2138 = vld [vmem:[%s8 + $0x1fc] sm:$0xf]
      %v2267 = vunpack.c.l.b16 %v2011
      %v2268 = vunpack.c.l.b16 %v2012
      %v2269 = vunpack.c.l.b16 %v2013
      %v2270 = vunpack.c.l.b16 %v2014
      %v2271 = vunpack.c.l.b16 %v2015
      %v2272 = vunpack.c.l.b16 %v2016
      %v2273 = vunpack.c.l.b16 %v2017
      %v2274 = vunpack.c.l.b16 %v2018
      %v2275 = vunpack.c.l.b16 %v2019
      %v2276 = vunpack.c.l.b16 %v2020
      %v2277 = vunpack.c.l.b16 %v2021
      %v2278 = vunpack.c.l.b16 %v2022
      %v2279 = vunpack.c.l.b16 %v2023
      %v2280 = vunpack.c.l.b16 %v2024
      %v2281 = vunpack.c.l.b16 %v2025
      %v2282 = vunpack.c.l.b16 %v2026
      %v2283 = vunpack.c.l.b16 %v2027
      %v2284 = vunpack.c.l.b16 %v2028
      %v2285 = vunpack.c.l.b16 %v2029
      %v2286 = vunpack.c.l.b16 %v2030
      %v2287 = vunpack.c.l.b16 %v2031
      %v2288 = vunpack.c.l.b16 %v2032
      %v2289 = vunpack.c.l.b16 %v2033
      %v2290 = vunpack.c.l.b16 %v2034
      %v2291 = vunpack.c.l.b16 %v2035
      %v2292 = vunpack.c.l.b16 %v2036
      %v2293 = vunpack.c.l.b16 %v2037
      %v2294 = vunpack.c.l.b16 %v2038
      %v2295 = vunpack.c.l.b16 %v2039
      %v2296 = vunpack.c.l.b16 %v2040
      %v2297 = vunpack.c.l.b16 %v2041
      %v2298 = vunpack.c.l.b16 %v2042
      %v2299 = vunpack.c.l.b16 %v2043
      %v2300 = vunpack.c.l.b16 %v2044
      %v2301 = vunpack.c.l.b16 %v2045
      %v2302 = vunpack.c.l.b16 %v2046
      %v2303 = vunpack.c.l.b16 %v2047
      %v2304 = vunpack.c.l.b16 %v2048
      %v2305 = vunpack.c.l.b16 %v2049
      %v2306 = vunpack.c.l.b16 %v2050
      %v2307 = vunpack.c.l.b16 %v2051
      %v2308 = vunpack.c.l.b16 %v2052
      %v2309 = vunpack.c.l.b16 %v2053
      %v2310 = vunpack.c.l.b16 %v2054
      %v2311 = vunpack.c.l.b16 %v2055
      %v2312 = vunpack.c.l.b16 %v2056
      %v2313 = vunpack.c.l.b16 %v2057
      %v2314 = vunpack.c.l.b16 %v2058
      %v2315 = vunpack.c.l.b16 %v2059
      %v2316 = vunpack.c.l.b16 %v2060
      %v2317 = vunpack.c.l.b16 %v2061
      %v2318 = vunpack.c.l.b16 %v2062
      %v2319 = vunpack.c.l.b16 %v2063
      %v2320 = vunpack.c.l.b16 %v2064
      %v2321 = vunpack.c.l.b16 %v2065
      %v2322 = vunpack.c.l.b16 %v2066
      %v2323 = vunpack.c.l.b16 %v2067
      %v2324 = vunpack.c.l.b16 %v2068
      %v2325 = vunpack.c.l.b16 %v2069
      %v2326 = vunpack.c.l.b16 %v2070
      %v2327 = vunpack.c.l.b16 %v2071
      %v2328 = vunpack.c.l.b16 %v2072
      %v2329 = vunpack.c.l.b16 %v2073
      %v2330 = vunpack.c.l.b16 %v2074
      %v2331 = vunpack.c.l.b16 %v2075
      %v2332 = vunpack.c.l.b16 %v2076
      %v2333 = vunpack.c.l.b16 %v2077
      %v2334 = vunpack.c.l.b16 %v2078
      %v2335 = vunpack.c.l.b16 %v2079
      %v2336 = vunpack.c.l.b16 %v2080
      %v2337 = vunpack.c.l.b16 %v2081
      %v2338 = vunpack.c.l.b16 %v2082
      %v2339 = vunpack.c.l.b16 %v2083
      %v2340 = vunpack.c.l.b16 %v2084
      %v2341 = vunpack.c.l.b16 %v2085
      %v2342 = vunpack.c.l.b16 %v2086
      %v2343 = vunpack.c.l.b16 %v2087
      %v2344 = vunpack.c.l.b16 %v2088
      %v2345 = vunpack.c.l.b16 %v2089
      %v2346 = vunpack.c.l.b16 %v2090
      %v2347 = vunpack.c.l.b16 %v2091
      %v2348 = vunpack.c.l.b16 %v2092
      %v2349 = vunpack.c.l.b16 %v2093
      %v2350 = vunpack.c.l.b16 %v2094
      %v2351 = vunpack.c.l.b16 %v2095
      %v2352 = vunpack.c.l.b16 %v2096
      %v2353 = vunpack.c.l.b16 %v2097
      %v2354 = vunpack.c.l.b16 %v2098
      %v2355 = vunpack.c.l.b16 %v2099
      %v2356 = vunpack.c.l.b16 %v2100
      %v2357 = vunpack.c.l.b16 %v2101
      %v2358 = vunpack.c.l.b16 %v2102
      %v2359 = vunpack.c.l.b16 %v2103
      %v2360 = vunpack.c.l.b16 %v2104
      %v2361 = vunpack.c.l.b16 %v2105
      %v2362 = vunpack.c.l.b16 %v2106
      %v2363 = vunpack.c.l.b16 %v2107
      %v2364 = vunpack.c.l.b16 %v2108
      %v2365 = vunpack.c.l.b16 %v2109
      %v2366 = vunpack.c.l.b16 %v2110
      %v2367 = vunpack.c.l.b16 %v2111
      %v2368 = vunpack.c.l.b16 %v2112
      %v2369 = vunpack.c.l.b16 %v2113
      %v2370 = vunpack.c.l.b16 %v2114
      %v2371 = vunpack.c.l.b16 %v2115
      %v2372 = vunpack.c.l.b16 %v2116
      %v2373 = vunpack.c.l.b16 %v2117
      %v2374 = vunpack.c.l.b16 %v2118
      %v2375 = vunpack.c.l.b16 %v2119
      %v2376 = vunpack.c.l.b16 %v2120
      %v2377 = vunpack.c.l.b16 %v2121
      %v2378 = vunpack.c.l.b16 %v2122
      %v2379 = vunpack.c.l.b16 %v2123
      %v2380 = vunpack.c.l.b16 %v2124
      %v2381 = vunpack.c.l.b16 %v2125
      %v2382 = vunpack.c.l.b16 %v2126
      %v2383 = vunpack.c.l.b16 %v2127
      %v2384 = vunpack.c.l.b16 %v2128
      %v2385 = vunpack.c.l.b16 %v2129
      %v2386 = vunpack.c.l.b16 %v2130
      %v2387 = vunpack.c.l.b16 %v2131
      %v2388 = vunpack.c.l.b16 %v2132
      %v2389 = vunpack.c.l.b16 %v2133
      %v2390 = vunpack.c.l.b16 %v2134
      %v2391 = vunpack.c.l.b16 %v2135
      %v2392 = vunpack.c.l.b16 %v2136
      %v2393 = vunpack.c.l.b16 %v2137
      %v2394 = vunpack.c.l.b16 %v2138
      %v2395 = vpack.c.b16 %v2268, %v2267
      %v2396 = vpack.c.b16 %v2270, %v2269
      %v2397 = vpack.c.b16 %v2272, %v2271
      %v2398 = vpack.c.b16 %v2274, %v2273
      %v2399 = vpack.c.b16 %v2276, %v2275
      %v2400 = vpack.c.b16 %v2278, %v2277
      %v2401 = vpack.c.b16 %v2280, %v2279
      %v2402 = vpack.c.b16 %v2282, %v2281
      %v2403 = vpack.c.b16 %v2284, %v2283
      %v2404 = vpack.c.b16 %v2286, %v2285
      %v2405 = vpack.c.b16 %v2288, %v2287
      %v2406 = vpack.c.b16 %v2290, %v2289
      %v2407 = vpack.c.b16 %v2292, %v2291
      %v2408 = vpack.c.b16 %v2294, %v2293
      %v2409 = vpack.c.b16 %v2296, %v2295
      %v2410 = vpack.c.b16 %v2298, %v2297
      %v2411 = vpack.c.b16 %v2300, %v2299
      %v2412 = vpack.c.b16 %v2302, %v2301
      %v2413 = vpack.c.b16 %v2304, %v2303
      %v2414 = vpack.c.b16 %v2306, %v2305
      %v2415 = vpack.c.b16 %v2308, %v2307
      %v2416 = vpack.c.b16 %v2310, %v2309
      %v2417 = vpack.c.b16 %v2312, %v2311
      %v2418 = vpack.c.b16 %v2314, %v2313
      %v2419 = vpack.c.b16 %v2316, %v2315
      %v2420 = vpack.c.b16 %v2318, %v2317
      %v2421 = vpack.c.b16 %v2320, %v2319
      %v2422 = vpack.c.b16 %v2322, %v2321
      %v2423 = vpack.c.b16 %v2324, %v2323
      %v2424 = vpack.c.b16 %v2326, %v2325
      %v2425 = vpack.c.b16 %v2328, %v2327
      %v2426 = vpack.c.b16 %v2330, %v2329
      %v2427 = vpack.c.b16 %v2332, %v2331
      %v2428 = vpack.c.b16 %v2334, %v2333
      %v2429 = vpack.c.b16 %v2336, %v2335
      %v2430 = vpack.c.b16 %v2338, %v2337
      %v2431 = vpack.c.b16 %v2340, %v2339
      %v2432 = vpack.c.b16 %v2342, %v2341
      %v2433 = vpack.c.b16 %v2344, %v2343
      %v2434 = vpack.c.b16 %v2346, %v2345
      %v2435 = vpack.c.b16 %v2348, %v2347
      %v2436 = vpack.c.b16 %v2350, %v2349
      %v2437 = vpack.c.b16 %v2352, %v2351
      %v2438 = vpack.c.b16 %v2354, %v2353
      %v2439 = vpack.c.b16 %v2356, %v2355
      %v2440 = vpack.c.b16 %v2358, %v2357
      %v2441 = vpack.c.b16 %v2360, %v2359
      %v2442 = vpack.c.b16 %v2362, %v2361
      %v2443 = vpack.c.b16 %v2364, %v2363
      %v2444 = vpack.c.b16 %v2366, %v2365
      %v2445 = vpack.c.b16 %v2368, %v2367
      %v2446 = vpack.c.b16 %v2370, %v2369
      %v2447 = vpack.c.b16 %v2372, %v2371
      %v2448 = vpack.c.b16 %v2374, %v2373
      %v2449 = vpack.c.b16 %v2376, %v2375
      %v2450 = vpack.c.b16 %v2378, %v2377
      %v2451 = vpack.c.b16 %v2380, %v2379
      %v2452 = vpack.c.b16 %v2382, %v2381
      %v2453 = vpack.c.b16 %v2384, %v2383
      %v2454 = vpack.c.b16 %v2386, %v2385
      %v2455 = vpack.c.b16 %v2388, %v2387
      %v2456 = vpack.c.b16 %v2390, %v2389
      %v2457 = vpack.c.b16 %v2392, %v2391
      %v2458 = vpack.c.b16 %v2394, %v2393
      %2523 = vmatpush.bf16.msra.mxu0 %v2402
      %2524 = vmatpush.bf16.msra.mxu0 %v2401
      %2525 = vmatpush.bf16.msra.mxu0 %v2400
      %2526 = vmatpush.bf16.msra.mxu0 %v2399
      %2527 = vmatpush.bf16.msra.mxu0 %v2398
      %2528 = vmatpush.bf16.msra.mxu0 %v2397
      %2529 = vmatpush.bf16.msra.mxu0 %v2396
      %2530 = vmatpush.bf16.msra.mxu0 %v2395
      %2531 = vmatmul.bf16.gmra.mxu0 %v1947
      %v2532 = vpop.f32.mrf.mxu0
      %v2533 = vadd.f32 0.0, %v2532
      %v2534 = vpop.f32.mrf.mxu0
      %v2535 = vadd.f32 0.0, %v2534
      %2536 = vmatmul.bf16.gmra.mxu0 %v1955
      %v2537 = vpop.f32.mrf.mxu0
      %v2538 = vadd.f32 0.0, %v2537
      %v2539 = vpop.f32.mrf.mxu0
      %v2540 = vadd.f32 0.0, %v2539
      %2541 = vmatmul.bf16.gmra.mxu0 %v1963
      %v2542 = vpop.f32.mrf.mxu0
      %v2543 = vadd.f32 0.0, %v2542
      %v2544 = vpop.f32.mrf.mxu0
      %v2545 = vadd.f32 0.0, %v2544
      %2546 = vmatmul.bf16.gmra.mxu0 %v1971
      %v2547 = vpop.f32.mrf.mxu0
      %v2548 = vadd.f32 0.0, %v2547
      %v2549 = vpop.f32.mrf.mxu0
      %v2550 = vadd.f32 0.0, %v2549
      %2551 = vmatmul.bf16.gmra.mxu0 %v1979
      %v2552 = vpop.f32.mrf.mxu0
      %v2553 = vadd.f32 0.0, %v2552
      %v2554 = vpop.f32.mrf.mxu0
      %v2555 = vadd.f32 0.0, %v2554
      %2556 = vmatmul.bf16.gmra.mxu0 %v1987
      %v2557 = vpop.f32.mrf.mxu0
      %v2558 = vadd.f32 0.0, %v2557
      %v2559 = vpop.f32.mrf.mxu0
      %v2560 = vadd.f32 0.0, %v2559
      %2561 = vmatmul.bf16.gmra.mxu0 %v1995
      %v2562 = vpop.f32.mrf.mxu0
      %v2563 = vadd.f32 0.0, %v2562
      %v2564 = vpop.f32.mrf.mxu0
      %v2565 = vadd.f32 0.0, %v2564
      %2566 = vmatmul.bf16.gmra.mxu0 %v2003
      %v2567 = vpop.f32.mrf.mxu0
      %v2568 = vadd.f32 0.0, %v2567
      %v2569 = vpop.f32.mrf.mxu0
      %v2570 = vadd.f32 0.0, %v2569
      %2571 = vdwg.mxu0
      %2572 = vmatpush.bf16.msra.mxu0 %v2410
      %2573 = vmatpush.bf16.msra.mxu0 %v2409
      %2574 = vmatpush.bf16.msra.mxu0 %v2408
      %2575 = vmatpush.bf16.msra.mxu0 %v2407
      %2576 = vmatpush.bf16.msra.mxu0 %v2406
      %2577 = vmatpush.bf16.msra.mxu0 %v2405
      %2578 = vmatpush.bf16.msra.mxu0 %v2404
      %2579 = vmatpush.bf16.msra.mxu0 %v2403
      %2580 = vmatmul.bf16.gmra.mxu0 %v1948
      %v2581 = vpop.f32.mrf.mxu0
      %v2582 = vadd.f32 %v2533, %v2581
      %v2583 = vpop.f32.mrf.mxu0
      %v2584 = vadd.f32 %v2535, %v2583
      %2585 = vmatmul.bf16.gmra.mxu0 %v1956
      %v2586 = vpop.f32.mrf.mxu0
      %v2587 = vadd.f32 %v2538, %v2586
      %v2588 = vpop.f32.mrf.mxu0
      %v2589 = vadd.f32 %v2540, %v2588
      %2590 = vmatmul.bf16.gmra.mxu0 %v1964
      %v2591 = vpop.f32.mrf.mxu0
      %v2592 = vadd.f32 %v2543, %v2591
      %v2593 = vpop.f32.mrf.mxu0
      %v2594 = vadd.f32 %v2545, %v2593
      %2595 = vmatmul.bf16.gmra.mxu0 %v1972
      %v2596 = vpop.f32.mrf.mxu0
      %v2597 = vadd.f32 %v2548, %v2596
      %v2598 = vpop.f32.mrf.mxu0
      %v2599 = vadd.f32 %v2550, %v2598
      %2600 = vmatmul.bf16.gmra.mxu0 %v1980
      %v2601 = vpop.f32.mrf.mxu0
      %v2602 = vadd.f32 %v2553, %v2601
      %v2603 = vpop.f32.mrf.mxu0
      %v2604 = vadd.f32 %v2555, %v2603
      %2605 = vmatmul.bf16.gmra.mxu0 %v1988
      %v2606 = vpop.f32.mrf.mxu0
      %v2607 = vadd.f32 %v2558, %v2606
      %v2608 = vpop.f32.mrf.mxu0
      %v2609 = vadd.f32 %v2560, %v2608
      %2610 = vmatmul.bf16.gmra.mxu0 %v1996
      %v2611 = vpop.f32.mrf.mxu0
      %v2612 = vadd.f32 %v2563, %v2611
      %v2613 = vpop.f32.mrf.mxu0
      %v2614 = vadd.f32 %v2565, %v2613
      %2615 = vmatmul.bf16.gmra.mxu0 %v2004
      %v2616 = vpop.f32.mrf.mxu0
      %v2617 = vadd.f32 %v2568, %v2616
      %v2618 = vpop.f32.mrf.mxu0
      %v2619 = vadd.f32 %v2570, %v2618
      %2620 = vdwg.mxu0
      %2621 = vmatpush.bf16.msra.mxu0 %v2418
      %2622 = vmatpush.bf16.msra.mxu0 %v2417
      %2623 = vmatpush.bf16.msra.mxu0 %v2416
      %2624 = vmatpush.bf16.msra.mxu0 %v2415
      %2625 = vmatpush.bf16.msra.mxu0 %v2414
      %2626 = vmatpush.bf16.msra.mxu0 %v2413
      %2627 = vmatpush.bf16.msra.mxu0 %v2412
      %2628 = vmatpush.bf16.msra.mxu0 %v2411
      %2629 = vmatmul.bf16.gmra.mxu0 %v1949
      %v2630 = vpop.f32.mrf.mxu0
      %v2631 = vadd.f32 %v2582, %v2630
      %v2632 = vpop.f32.mrf.mxu0
      %v2633 = vadd.f32 %v2584, %v2632
      %2634 = vmatmul.bf16.gmra.mxu0 %v1957
      %v2635 = vpop.f32.mrf.mxu0
      %v2636 = vadd.f32 %v2587, %v2635
      %v2637 = vpop.f32.mrf.mxu0
      %v2638 = vadd.f32 %v2589, %v2637
      %2639 = vmatmul.bf16.gmra.mxu0 %v1965
      %v2640 = vpop.f32.mrf.mxu0
      %v2641 = vadd.f32 %v2592, %v2640
      %v2642 = vpop.f32.mrf.mxu0
      %v2643 = vadd.f32 %v2594, %v2642
      %2644 = vmatmul.bf16.gmra.mxu0 %v1973
      %v2645 = vpop.f32.mrf.mxu0
      %v2646 = vadd.f32 %v2597, %v2645
      %v2647 = vpop.f32.mrf.mxu0
      %v2648 = vadd.f32 %v2599, %v2647
      %2649 = vmatmul.bf16.gmra.mxu0 %v1981
      %v2650 = vpop.f32.mrf.mxu0
      %v2651 = vadd.f32 %v2602, %v2650
      %v2652 = vpop.f32.mrf.mxu0
      %v2653 = vadd.f32 %v2604, %v2652
      %2654 = vmatmul.bf16.gmra.mxu0 %v1989
      %v2655 = vpop.f32.mrf.mxu0
      %v2656 = vadd.f32 %v2607, %v2655
      %v2657 = vpop.f32.mrf.mxu0
      %v2658 = vadd.f32 %v2609, %v2657
      %2659 = vmatmul.bf16.gmra.mxu0 %v1997
      %v2660 = vpop.f32.mrf.mxu0
      %v2661 = vadd.f32 %v2612, %v2660
      %v2662 = vpop.f32.mrf.mxu0
      %v2663 = vadd.f32 %v2614, %v2662
      %2664 = vmatmul.bf16.gmra.mxu0 %v2005
      %v2665 = vpop.f32.mrf.mxu0
      %v2666 = vadd.f32 %v2617, %v2665
      %v2667 = vpop.f32.mrf.mxu0
      %v2668 = vadd.f32 %v2619, %v2667
      %2669 = vdwg.mxu0
      %2670 = vmatpush.bf16.msra.mxu0 %v2426
      %2671 = vmatpush.bf16.msra.mxu0 %v2425
      %2672 = vmatpush.bf16.msra.mxu0 %v2424
      %2673 = vmatpush.bf16.msra.mxu0 %v2423
      %2674 = vmatpush.bf16.msra.mxu0 %v2422
      %2675 = vmatpush.bf16.msra.mxu0 %v2421
      %2676 = vmatpush.bf16.msra.mxu0 %v2420
      %2677 = vmatpush.bf16.msra.mxu0 %v2419
      %2678 = vmatmul.bf16.gmra.mxu0 %v1950
      %v2679 = vpop.f32.mrf.mxu0
      %v2680 = vadd.f32 %v2631, %v2679
      %v2681 = vpop.f32.mrf.mxu0
      %v2682 = vadd.f32 %v2633, %v2681
      %2683 = vmatmul.bf16.gmra.mxu0 %v1958
      %v2684 = vpop.f32.mrf.mxu0
      %v2685 = vadd.f32 %v2636, %v2684
      %v2686 = vpop.f32.mrf.mxu0
      %v2687 = vadd.f32 %v2638, %v2686
      %2688 = vmatmul.bf16.gmra.mxu0 %v1966
      %v2689 = vpop.f32.mrf.mxu0
      %v2690 = vadd.f32 %v2641, %v2689
      %v2691 = vpop.f32.mrf.mxu0
      %v2692 = vadd.f32 %v2643, %v2691
      %2693 = vmatmul.bf16.gmra.mxu0 %v1974
      %v2694 = vpop.f32.mrf.mxu0
      %v2695 = vadd.f32 %v2646, %v2694
      %v2696 = vpop.f32.mrf.mxu0
      %v2697 = vadd.f32 %v2648, %v2696
      %2698 = vmatmul.bf16.gmra.mxu0 %v1982
      %v2699 = vpop.f32.mrf.mxu0
      %v2700 = vadd.f32 %v2651, %v2699
      %v2701 = vpop.f32.mrf.mxu0
      %v2702 = vadd.f32 %v2653, %v2701
      %2703 = vmatmul.bf16.gmra.mxu0 %v1990
      %v2704 = vpop.f32.mrf.mxu0
      %v2705 = vadd.f32 %v2656, %v2704
      %v2706 = vpop.f32.mrf.mxu0
      %v2707 = vadd.f32 %v2658, %v2706
      %2708 = vmatmul.bf16.gmra.mxu0 %v1998
      %v2709 = vpop.f32.mrf.mxu0
      %v2710 = vadd.f32 %v2661, %v2709
      %v2711 = vpop.f32.mrf.mxu0
      %v2712 = vadd.f32 %v2663, %v2711
      %2713 = vmatmul.bf16.gmra.mxu0 %v2006
      %v2714 = vpop.f32.mrf.mxu0
      %v2715 = vadd.f32 %v2666, %v2714
      %v2716 = vpop.f32.mrf.mxu0
      %v2717 = vadd.f32 %v2668, %v2716
      %2718 = vdwg.mxu0
      %2719 = vmatpush.bf16.msra.mxu0 %v2434
      %2720 = vmatpush.bf16.msra.mxu0 %v2433
      %2721 = vmatpush.bf16.msra.mxu0 %v2432
      %2722 = vmatpush.bf16.msra.mxu0 %v2431
      %2723 = vmatpush.bf16.msra.mxu0 %v2430
      %2724 = vmatpush.bf16.msra.mxu0 %v2429
      %2725 = vmatpush.bf16.msra.mxu0 %v2428
      %2726 = vmatpush.bf16.msra.mxu0 %v2427
      %2727 = vmatmul.bf16.gmra.mxu0 %v1951
      %v2728 = vpop.f32.mrf.mxu0
      %v2729 = vadd.f32 %v2680, %v2728
      %v2730 = vpop.f32.mrf.mxu0
      %v2731 = vadd.f32 %v2682, %v2730
      %2732 = vmatmul.bf16.gmra.mxu0 %v1959
      %v2733 = vpop.f32.mrf.mxu0
      %v2734 = vadd.f32 %v2685, %v2733
      %v2735 = vpop.f32.mrf.mxu0
      %v2736 = vadd.f32 %v2687, %v2735
      %2737 = vmatmul.bf16.gmra.mxu0 %v1967
      %v2738 = vpop.f32.mrf.mxu0
      %v2739 = vadd.f32 %v2690, %v2738
      %v2740 = vpop.f32.mrf.mxu0
      %v2741 = vadd.f32 %v2692, %v2740
      %2742 = vmatmul.bf16.gmra.mxu0 %v1975
      %v2743 = vpop.f32.mrf.mxu0
      %v2744 = vadd.f32 %v2695, %v2743
      %v2745 = vpop.f32.mrf.mxu0
      %v2746 = vadd.f32 %v2697, %v2745
      %2747 = vmatmul.bf16.gmra.mxu0 %v1983
      %v2748 = vpop.f32.mrf.mxu0
      %v2749 = vadd.f32 %v2700, %v2748
      %v2750 = vpop.f32.mrf.mxu0
      %v2751 = vadd.f32 %v2702, %v2750
      %2752 = vmatmul.bf16.gmra.mxu0 %v1991
      %v2753 = vpop.f32.mrf.mxu0
      %v2754 = vadd.f32 %v2705, %v2753
      %v2755 = vpop.f32.mrf.mxu0
      %v2756 = vadd.f32 %v2707, %v2755
      %2757 = vmatmul.bf16.gmra.mxu0 %v1999
      %v2758 = vpop.f32.mrf.mxu0
      %v2759 = vadd.f32 %v2710, %v2758
      %v2760 = vpop.f32.mrf.mxu0
      %v2761 = vadd.f32 %v2712, %v2760
      %2762 = vmatmul.bf16.gmra.mxu0 %v2007
      %v2763 = vpop.f32.mrf.mxu0
      %v2764 = vadd.f32 %v2715, %v2763
      %v2765 = vpop.f32.mrf.mxu0
      %v2766 = vadd.f32 %v2717, %v2765
      %2767 = vdwg.mxu0
      %2768 = vmatpush.bf16.msra.mxu0 %v2442
      %2769 = vmatpush.bf16.msra.mxu0 %v2441
      %2770 = vmatpush.bf16.msra.mxu0 %v2440
      %2771 = vmatpush.bf16.msra.mxu0 %v2439
      %2772 = vmatpush.bf16.msra.mxu0 %v2438
      %2773 = vmatpush.bf16.msra.mxu0 %v2437
      %2774 = vmatpush.bf16.msra.mxu0 %v2436
      %2775 = vmatpush.bf16.msra.mxu0 %v2435
      %2776 = vmatmul.bf16.gmra.mxu0 %v1952
      %v2777 = vpop.f32.mrf.mxu0
      %v2778 = vadd.f32 %v2729, %v2777
      %v2779 = vpop.f32.mrf.mxu0
      %v2780 = vadd.f32 %v2731, %v2779
      %2781 = vmatmul.bf16.gmra.mxu0 %v1960
      %v2782 = vpop.f32.mrf.mxu0
      %v2783 = vadd.f32 %v2734, %v2782
      %v2784 = vpop.f32.mrf.mxu0
      %v2785 = vadd.f32 %v2736, %v2784
      %2786 = vmatmul.bf16.gmra.mxu0 %v1968
      %v2787 = vpop.f32.mrf.mxu0
      %v2788 = vadd.f32 %v2739, %v2787
      %v2789 = vpop.f32.mrf.mxu0
      %v2790 = vadd.f32 %v2741, %v2789
      %2791 = vmatmul.bf16.gmra.mxu0 %v1976
      %v2792 = vpop.f32.mrf.mxu0
      %v2793 = vadd.f32 %v2744, %v2792
      %v2794 = vpop.f32.mrf.mxu0
      %v2795 = vadd.f32 %v2746, %v2794
      %2796 = vmatmul.bf16.gmra.mxu0 %v1984
      %v2797 = vpop.f32.mrf.mxu0
      %v2798 = vadd.f32 %v2749, %v2797
      %v2799 = vpop.f32.mrf.mxu0
      %v2800 = vadd.f32 %v2751, %v2799
      %2801 = vmatmul.bf16.gmra.mxu0 %v1992
      %v2802 = vpop.f32.mrf.mxu0
      %v2803 = vadd.f32 %v2754, %v2802
      %v2804 = vpop.f32.mrf.mxu0
      %v2805 = vadd.f32 %v2756, %v2804
      %2806 = vmatmul.bf16.gmra.mxu0 %v2000
      %v2807 = vpop.f32.mrf.mxu0
      %v2808 = vadd.f32 %v2759, %v2807
      %v2809 = vpop.f32.mrf.mxu0
      %v2810 = vadd.f32 %v2761, %v2809
      %2811 = vmatmul.bf16.gmra.mxu0 %v2008
      %v2812 = vpop.f32.mrf.mxu0
      %v2813 = vadd.f32 %v2764, %v2812
      %v2814 = vpop.f32.mrf.mxu0
      %v2815 = vadd.f32 %v2766, %v2814
      %2816 = vdwg.mxu0
      %2817 = vmatpush.bf16.msra.mxu0 %v2450
      %2818 = vmatpush.bf16.msra.mxu0 %v2449
      %2819 = vmatpush.bf16.msra.mxu0 %v2448
      %2820 = vmatpush.bf16.msra.mxu0 %v2447
      %2821 = vmatpush.bf16.msra.mxu0 %v2446
      %2822 = vmatpush.bf16.msra.mxu0 %v2445
      %2823 = vmatpush.bf16.msra.mxu0 %v2444
      %2824 = vmatpush.bf16.msra.mxu0 %v2443
      %2825 = vmatmul.bf16.gmra.mxu0 %v1953
      %v2826 = vpop.f32.mrf.mxu0
      %v2827 = vadd.f32 %v2778, %v2826
      %v2828 = vpop.f32.mrf.mxu0
      %v2829 = vadd.f32 %v2780, %v2828
      %2830 = vmatmul.bf16.gmra.mxu0 %v1961
      %v2831 = vpop.f32.mrf.mxu0
      %v2832 = vadd.f32 %v2783, %v2831
      %v2833 = vpop.f32.mrf.mxu0
      %v2834 = vadd.f32 %v2785, %v2833
      %2835 = vmatmul.bf16.gmra.mxu0 %v1969
      %v2836 = vpop.f32.mrf.mxu0
      %v2837 = vadd.f32 %v2788, %v2836
      %v2838 = vpop.f32.mrf.mxu0
      %v2839 = vadd.f32 %v2790, %v2838
      %2840 = vmatmul.bf16.gmra.mxu0 %v1977
      %v2841 = vpop.f32.mrf.mxu0
      %v2842 = vadd.f32 %v2793, %v2841
      %v2843 = vpop.f32.mrf.mxu0
      %v2844 = vadd.f32 %v2795, %v2843
      %2845 = vmatmul.bf16.gmra.mxu0 %v1985
      %v2846 = vpop.f32.mrf.mxu0
      %v2847 = vadd.f32 %v2798, %v2846
      %v2848 = vpop.f32.mrf.mxu0
      %v2849 = vadd.f32 %v2800, %v2848
      %2850 = vmatmul.bf16.gmra.mxu0 %v1993
      %v2851 = vpop.f32.mrf.mxu0
      %v2852 = vadd.f32 %v2803, %v2851
      %v2853 = vpop.f32.mrf.mxu0
      %v2854 = vadd.f32 %v2805, %v2853
      %2855 = vmatmul.bf16.gmra.mxu0 %v2001
      %v2856 = vpop.f32.mrf.mxu0
      %v2857 = vadd.f32 %v2808, %v2856
      %v2858 = vpop.f32.mrf.mxu0
      %v2859 = vadd.f32 %v2810, %v2858
      %2860 = vmatmul.bf16.gmra.mxu0 %v2009
      %v2861 = vpop.f32.mrf.mxu0
      %v2862 = vadd.f32 %v2813, %v2861
      %v2863 = vpop.f32.mrf.mxu0
      %v2864 = vadd.f32 %v2815, %v2863
      %2865 = vdwg.mxu0
      %2866 = vmatpush.bf16.msra.mxu0 %v2458
      %2867 = vmatpush.bf16.msra.mxu0 %v2457
      %2868 = vmatpush.bf16.msra.mxu0 %v2456
      %2869 = vmatpush.bf16.msra.mxu0 %v2455
      %2870 = vmatpush.bf16.msra.mxu0 %v2454
      %2871 = vmatpush.bf16.msra.mxu0 %v2453
      %2872 = vmatpush.bf16.msra.mxu0 %v2452
      %2873 = vmatpush.bf16.msra.mxu0 %v2451
      %2874 = vmatmul.bf16.gmra.mxu0 %v1954
      %v2875 = vpop.f32.mrf.mxu0
      %v2876 = vadd.f32 %v2827, %v2875
      %v2877 = vpop.f32.mrf.mxu0
      %v2878 = vadd.f32 %v2829, %v2877
      %2879 = vmatmul.bf16.gmra.mxu0 %v1962
      %v2880 = vpop.f32.mrf.mxu0
      %v2881 = vadd.f32 %v2832, %v2880
      %v2882 = vpop.f32.mrf.mxu0
      %v2883 = vadd.f32 %v2834, %v2882
      %2884 = vmatmul.bf16.gmra.mxu0 %v1970
      %v2885 = vpop.f32.mrf.mxu0
      %v2886 = vadd.f32 %v2837, %v2885
      %v2887 = vpop.f32.mrf.mxu0
      %v2888 = vadd.f32 %v2839, %v2887
      %2889 = vmatmul.bf16.gmra.mxu0 %v1978
      %v2890 = vpop.f32.mrf.mxu0
      %v2891 = vadd.f32 %v2842, %v2890
      %v2892 = vpop.f32.mrf.mxu0
      %v2893 = vadd.f32 %v2844, %v2892
      %2894 = vmatmul.bf16.gmra.mxu0 %v1986
      %v2895 = vpop.f32.mrf.mxu0
      %v2896 = vadd.f32 %v2847, %v2895
      %v2897 = vpop.f32.mrf.mxu0
      %v2898 = vadd.f32 %v2849, %v2897
      %2899 = vmatmul.bf16.gmra.mxu0 %v1994
      %v2900 = vpop.f32.mrf.mxu0
      %v2901 = vadd.f32 %v2852, %v2900
      %v2902 = vpop.f32.mrf.mxu0
      %v2903 = vadd.f32 %v2854, %v2902
      %2904 = vmatmul.bf16.gmra.mxu0 %v2002
      %v2905 = vpop.f32.mrf.mxu0
      %v2906 = vadd.f32 %v2857, %v2905
      %v2907 = vpop.f32.mrf.mxu0
      %v2908 = vadd.f32 %v2859, %v2907
      %2909 = vmatmul.bf16.gmra.mxu0 %v2010
      %v2910 = vpop.f32.mrf.mxu0
      %v2911 = vadd.f32 %v2862, %v2910
      %v2912 = vpop.f32.mrf.mxu0
      %v2913 = vadd.f32 %v2864, %v2912
      %2914 = vdwg.mxu0
      %s2915 = smul.u32 %s24, 64
      %v2916 = vlaneseq
      %v2917 = vshrl.u32 %v2916, 7
      %v2918 = vadd.s32 %v2917, 8
      %v2919 = vadd.s32 %v2917, 16
      %v2920 = vadd.s32 %v2917, 24
      %v2921 = vadd.s32 %v2917, 32
      %v2922 = vadd.s32 %v2917, 40
      %v2923 = vadd.s32 %v2917, 48
      %v2924 = vadd.s32 %v2917, 56
      %v2925 = vstv %s2915
      %v2926 = vadd.s32 %v2917, %v2925
      %v2927 = vadd.s32 %v2918, %v2925
      %v2928 = vadd.s32 %v2919, %v2925
      %v2929 = vadd.s32 %v2920, %v2925
      %v2930 = vadd.s32 %v2921, %v2925
      %v2931 = vadd.s32 %v2922, %v2925
      %v2932 = vadd.s32 %v2923, %v2925
      %v2933 = vadd.s32 %v2924, %v2925
      %v2934 = vld [vmem:[%s371] sm:$0x1]
      %v2935 = vperm.slane %v2934, 0
      %vm2936 = vcmp.eq.s32.totalorder %v2926, %v2935
      %vm2937 = vcmp.eq.s32.totalorder %v2927, %v2935
      %vm2938 = vcmp.eq.s32.totalorder %v2928, %v2935
      %vm2939 = vcmp.eq.s32.totalorder %v2929, %v2935
      %vm2940 = vcmp.eq.s32.totalorder %v2930, %v2935
      %vm2941 = vcmp.eq.s32.totalorder %v2931, %v2935
      %vm2942 = vcmp.eq.s32.totalorder %v2932, %v2935
      %vm2943 = vcmp.eq.s32.totalorder %v2933, %v2935
      %v2944 = vsel %vm2936, 1, 0
      %v2945 = vsel %vm2937, 1, 0
      %v2946 = vsel %vm2938, 1, 0
      %v2947 = vsel %vm2939, 1, 0
      %v2948 = vsel %vm2940, 1, 0
      %v2949 = vsel %vm2941, 1, 0
      %v2950 = vsel %vm2942, 1, 0
      %v2951 = vsel %vm2943, 1, 0
      %v2952 = vcvt.s32.f32 %v2944
      %v2953 = vcvt.s32.f32 %v2945
      %v2954 = vcvt.s32.f32 %v2946
      %v2955 = vcvt.s32.f32 %v2947
      %v2956 = vcvt.s32.f32 %v2948
      %v2957 = vcvt.s32.f32 %v2949
      %v2958 = vcvt.s32.f32 %v2950
      %v2959 = vcvt.s32.f32 %v2951
      %v2960 = vpack.c.bf16 %v2953, %v2952
      %v2961 = vpack.c.bf16 %v2955, %v2954
      %v2962 = vpack.c.bf16 %v2957, %v2956
      %v2963 = vpack.c.bf16 %v2959, %v2958
      %v2964 = vld [vmem:[%s382] sm:$0xff]
      %v2965 = vld [vmem:[%s382 + $0x8] sm:$0xff]
      %v2966 = vld [vmem:[%s382 + $0x10] sm:$0xff]
      %v2967 = vld [vmem:[%s382 + $0x18] sm:$0xff]
      %v2968 = vld [vmem:[%s382 + $0x20] sm:$0xff]
      %v2969 = vld [vmem:[%s382 + $0x28] sm:$0xff]
      %v2970 = vld [vmem:[%s382 + $0x30] sm:$0xff]
      %v2971 = vld [vmem:[%s382 + $0x38] sm:$0xff]
      %v2972 = vpack.c.bf16 %v2878, %v2876
      %v2973 = vpack.c.bf16 %v2883, %v2881
      %v2974 = vpack.c.bf16 %v2888, %v2886
      %v2975 = vpack.c.bf16 %v2893, %v2891
      %v2976 = vpack.c.bf16 %v2898, %v2896
      %v2977 = vpack.c.bf16 %v2903, %v2901
      %v2978 = vpack.c.bf16 %v2908, %v2906
      %v2979 = vpack.c.bf16 %v2913, %v2911
      %2980 = vmatpush.bf16.msra.mxu0 %v2979
      %2981 = vmatpush.bf16.msra.mxu0 %v2978
      %2982 = vmatpush.bf16.msra.mxu0 %v2977
      %2983 = vmatpush.bf16.msra.mxu0 %v2976
      %2984 = vmatpush.bf16.msra.mxu0 %v2975
      %2985 = vmatpush.bf16.msra.mxu0 %v2974
      %2986 = vmatpush.bf16.msra.mxu0 %v2973
      %2987 = vmatpush.bf16.msra.mxu0 %v2972
      %2988 = vmatmul.bf16.gmra.mxu0 %v2960
      %v2989 = vpop.f32.mrf.mxu0
      %v2990 = vadd.f32 0.0, %v2989
      %v2991 = vpop.f32.mrf.mxu0
      %v2992 = vadd.f32 0.0, %v2991
      %2993 = vmatmul.bf16.gmra.mxu0 %v2961
      %v2994 = vpop.f32.mrf.mxu0
      %v2995 = vadd.f32 0.0, %v2994
      %v2996 = vpop.f32.mrf.mxu0
      %v2997 = vadd.f32 0.0, %v2996
      %2998 = vmatmul.bf16.gmra.mxu0 %v2962
      %v2999 = vpop.f32.mrf.mxu0
      %v3000 = vadd.f32 0.0, %v2999
      %v3001 = vpop.f32.mrf.mxu0
      %v3002 = vadd.f32 0.0, %v3001
      %3003 = vmatmul.bf16.gmra.mxu0 %v2963
      %v3004 = vpop.f32.mrf.mxu0
      %v3005 = vadd.f32 0.0, %v3004
      %v3006 = vpop.f32.mrf.mxu0
      %v3007 = vadd.f32 0.0, %v3006
      %3008 = vdwg.mxu0
      %v3009 = vadd.f32 %v2964, %v2990
      %v3010 = vadd.f32 %v2965, %v2992
      %v3011 = vadd.f32 %v2966, %v2995
      %v3012 = vadd.f32 %v2967, %v2997
      %v3013 = vadd.f32 %v2968, %v3000
      %v3014 = vadd.f32 %v2969, %v3002
      %v3015 = vadd.f32 %v2970, %v3005
      %v3016 = vadd.f32 %v2971, %v3007
      %3017 = vst.msk [vmem:[%s382] sm:$0xff] %vm654, %v3009
      %3018 = vst.msk [vmem:[%s382 + $0x8] sm:$0xff] %vm654, %v3010
      %3019 = vst.msk [vmem:[%s382 + $0x10] sm:$0xff] %vm654, %v3011
      %3020 = vst.msk [vmem:[%s382 + $0x18] sm:$0xff] %vm654, %v3012
      %3021 = vst.msk [vmem:[%s382 + $0x20] sm:$0xff] %vm654, %v3013
      %3022 = vst.msk [vmem:[%s382 + $0x28] sm:$0xff] %vm654, %v3014
      %3023 = vst.msk [vmem:[%s382 + $0x30] sm:$0xff] %vm654, %v3015
      %3024 = vst.msk [vmem:[%s382 + $0x38] sm:$0xff] %vm654, %v3016
      %s3025 = smul.u32 8, %s24
      %p3026 = scmp.lt.s32.totalorder %s3025, 7
      %s3027 = scalar_select %p3026, %s3025, 7
      %s3028 = smul.addr %s3027, 8
      %s3029 = scalar_lea.vmem %s9, %s3028
      // Predicated region
      $region61: #{tpu_custom_call.1} parent=55 // pred_check
        %p3030 = pneg %p254
      $region62: #{tpu_custom_call.1} parent=55 // pred_check_branch
        %3032 = sbr.rel (%p3030) target = $region64
      $region63: #{tpu_custom_call.1} parent=55 // pred_region
        %s3033 = smul.u32 8, %s24
      $region64: #{tpu_custom_call.1} parent=55 // pred_fallthru
        _
      // Predicated region
      $region65: #{tpu_custom_call.1} parent=55 // pred_check
        %p3034 = pneg %p254
      $region66: #{tpu_custom_call.1} parent=55 // pred_check_branch
        %3036 = sbr.rel (%p3034) target = $region68
      $region67: #{tpu_custom_call.1} parent=55 // pred_region
        %s3037 = smul.u32 8, %s24
        %p3038 = scmp.lt.s32.totalorder %s3037, 7
        %s3039 = scalar_select %p3038, %s3037, 7
        %s3040 = smul.addr %s3039, 8
        %s3041 = scalar_lea.vmem %s9, %s3040
      $region68: #{tpu_custom_call.1} parent=55 // pred_fallthru
        _
    $region56: #{tpu_custom_call.1} parent=5 // pred_fallthru
      _
    %p3042 = scmp.le.s32.totalorder 2, %s15
    // Predicated region
    $region69: #{tpu_custom_call.1} parent=5 // pred_check
      %p3043 = pneg %p3042
    $region70: #{tpu_custom_call.1} parent=5 // pred_check_branch
      %3045 = sbr.rel (%p3043) target = $region72
    $region71: #{tpu_custom_call.1} parent=5 // pred_region
      %s3046 = ssub.s32 %s15, 2
    $region72: #{tpu_custom_call.1} parent=5 // pred_fallthru
      _
  $region6: #{tpu_custom_call.1} parent=0 // loop_footer
    %s19 = sadd.s32 1, %s15
  $region7: #{tpu_custom_call.1} parent=0 // loop_footer_branch
    %14 = sbr.rel target = $region3
  $region8: #{tpu_custom_call.1} parent=0 // loop_exit
    _

</llo_original>
